<compile_context>
chip_gen: v5e
topology: v5e:2x2
jax: 0.10.0
libtpu: 0.0.40
codegen_flags: <defaults>
</compile_context>

<pallas_src>
import functools

import jax
import jax.numpy as jnp
from jax.experimental import pallas as pl
from jax.experimental.pallas import tpu as pltpu


# ------------------------------ Pallas kernel -------------------------------

def _layernorm(x, gamma, beta, eps=1e-5):
    mu = jnp.mean(x, axis=-1, keepdims=True)
    var = jnp.mean((x - mu) ** 2, axis=-1, keepdims=True)
    return (x - mu) * jax.lax.rsqrt(var + eps) * gamma + beta


def encoder_layer_kernel(x_ref, wqkv_ref, bqkv_ref, wo_ref, bo_ref,
                         g1_ref, be1_ref, w1_ref, b1_ref, w2_ref, b2_ref,
                         g2_ref, be2_ref, o_ref,
                         *, num_heads, seq_len, batch_tile):
    l = pl.program_id(1)

    # Activations live in the resident output block across the layer sweep;
    # the HBM input is only read once per batch tile, at the first layer.
    @pl.when(l == 0)
    def _():
        o_ref[...] = x_ref[...]

    x = o_ref[...]                        # (rows, D) f32, resident in VMEM
    rows, D = x.shape
    H = num_heads
    dk = D // H
    S = seq_len
    bt = batch_tile
    cdt = jnp.bfloat16                    # MXU input dtype; accumulation f32

    # ---- fused QKV projection: one full-width (rows, D) @ (D, 3D) matmul ----
    qkv = jnp.dot(x.astype(cdt), wqkv_ref[0],
                  preferred_element_type=jnp.float32) + bqkv_ref[0]  # (rows, 3D)
    qkv = qkv.reshape(bt, S, 3 * D)       # batch explicit; S stays second-minor

    # ---- scaled dot-product attention, batched over the batch dim ----
    # Per head the scores are (bt, S, S): no cross-batch masking, no rows^2
    # work.  Heads are a short static unroll (single-batch-dim einsums only).
    ctx_heads = []
    for h in range(H):
        qh = qkv[:, :, h * dk:(h + 1) * dk].astype(cdt)              # (bt,S,dk)
        kh = qkv[:, :, D + h * dk:D + (h + 1) * dk].astype(cdt)
        vh = qkv[:, :, 2 * D + h * dk:2 * D + (h + 1) * dk].astype(cdt)
        s = jnp.einsum('bqd,bkd->bqk', qh, kh,
                       preferred_element_type=jnp.float32)           # (bt,S,S)
        s = s - jnp.max(s, axis=-1, keepdims=True)
        e = jnp.exp(s)
        p = e * pl.reciprocal(jnp.sum(e, axis=-1, keepdims=True), approx=True)
        ctx_heads.append(jnp.einsum('bqk,bkd->bqd', p.astype(cdt), vh,
                                    preferred_element_type=jnp.float32))
    ctx = jnp.concatenate(ctx_heads, axis=-1).reshape(rows, D)       # (rows, D)

    # ---- output projection: one full-width (rows, D) @ (D, D) matmul ----
    attn = jnp.dot(ctx.astype(cdt), wo_ref[0],
                   preferred_element_type=jnp.float32) + bo_ref[0]

    # ---- add & norm 1 (dropout = identity in eval mode) ----
    y = _layernorm(x + attn, g1_ref[0], be1_ref[0])

    # ---- position-wise FFN ----
    h1 = jnp.dot(y.astype(cdt), w1_ref[0],
                 preferred_element_type=jnp.float32) + b1_ref[0]
    h1 = jnp.maximum(h1, 0.0)
    ff = jnp.dot(h1.astype(cdt), w2_ref[0],
                 preferred_element_type=jnp.float32) + b2_ref[0]

    # ---- add & norm 2 ----
    o_ref[...] = _layernorm(y + ff, g2_ref[0], be2_ref[0])


def encoder_stack(x, p, *, num_heads, batch_tile=None):
    """x: (B, S, D) f32 activations. p: packed (layer-stacked) parameters."""
    B, S, D = x.shape
    L = p["w_qkv"].shape[0]
    d_ff = p["w1"].shape[2]
    if batch_tile is None:
        # nb = 1 keeps per-layer weight HBM traffic minimal (single-TC v5e /
        # v6e).  On v7x pass batch_tile = B // 2 so the "parallel" batch axis
        # shards across both TensorCores.
        batch_tile = B
    assert B % batch_tile == 0
    nb = B // batch_tile
    rows = batch_tile * S

    x_flat = x.reshape(B * S, D).astype(jnp.float32)

    def wspec(*shape):
        return pl.BlockSpec((1,) + shape, lambda bt, l: (l,) + (0,) * len(shape))

    in_specs = [
        pl.BlockSpec((rows, D), lambda bt, l: (bt, 0)),   # activations
        wspec(D, 3 * D), wspec(1, 3 * D),                 # fused QKV W / b
        wspec(D, D), wspec(1, D),                         # output proj W / b
        wspec(1, D), wspec(1, D),                         # norm1 gamma / beta
        wspec(D, d_ff), wspec(1, d_ff),                   # ffn w1 / b1
        wspec(d_ff, D), wspec(1, D),                      # ffn w2 / b2
        wspec(1, D), wspec(1, D),                         # norm2 gamma / beta
    ]
    out_spec = pl.BlockSpec((rows, D), lambda bt, l: (bt, 0))

    # VMEM budget: resident activation slab + double-buffered input slab +
    # double-buffered bf16 layer weights + f32 intermediates (qkv, ctx, attn,
    # h1, per-head scores).  Clamped so it is valid on every generation.
    w_bytes = (D * 3 * D + D * D + D * d_ff + d_ff * D) * 2 \
        + (3 * D + 7 * D + d_ff) * 4
    interm = rows * (3 * D + 3 * D + d_ff) * 4 \
        + batch_tile * num_heads * S * S * 4 * 4
    est = 3 * rows * D * 4 + 2 * w_bytes + interm
    vmem_limit = int(min(max(2 * est, 32 * 1024 * 1024), 64 * 1024 * 1024))

    kernel = functools.partial(encoder_layer_kernel, num_heads=num_heads,
                               seq_len=S, batch_tile=batch_tile)

    out = pl.pallas_call(
        kernel,
        out_shape=jax.ShapeDtypeStruct((B * S, D), jnp.float32),
        grid_spec=pltpu.PrefetchScalarGridSpec(
            num_scalar_prefetch=0,
            grid=(nb, L),
            in_specs=in_specs,
            out_specs=out_spec,
        ),
        compiler_params=pltpu.CompilerParams(
            dimension_semantics=("parallel", "arbitrary"),
            vmem_limit_bytes=vmem_limit),
        input_output_aliases={0: 0},
    )(x_flat, p["w_qkv"], p["b_qkv"], p["wo"], p["bo"],
      p["g1"], p["be1"], p["w1"], p["b1"], p["w2"], p["b2"],
      p["g2"], p["be2"])
    return out.reshape(B, S, D)


# ------------------------------ plain-JAX glue -------------------------------

def get_pos_encoding(max_seq_len, d_model):
    pos = jnp.arange(max_seq_len, dtype=jnp.float32)[:, None]
    i = jnp.arange(d_model, dtype=jnp.float32)[None, :]
    angle_rates = 1.0 / jnp.power(10000.0, 2.0 * jnp.floor(i / 2.0) / d_model)
    angle_rads = pos * angle_rates
    pos_enc = jnp.zeros((max_seq_len, d_model), dtype=jnp.float32)
    pos_enc = pos_enc.at[:, 0::2].set(jnp.sin(angle_rads[:, 0::2]))
    pos_enc = pos_enc.at[:, 1::2].set(jnp.cos(angle_rads[:, 1::2]))
    return pos_enc[None]                      # (1, max_seq_len, d_model)


def init_layer_params(key, d_model, d_ff):
    """Standard per-layer params in the x @ W + b layout (W = torch W.T)."""
    ks = jax.random.split(key, 6)
    s = 0.02
    return {
        "wq": s * jax.random.normal(ks[0], (d_model, d_model), jnp.float32),
        "bq": jnp.zeros((d_model,), jnp.float32),
        "wk": s * jax.random.normal(ks[1], (d_model, d_model), jnp.float32),
        "bk": jnp.zeros((d_model,), jnp.float32),
        "wv": s * jax.random.normal(ks[2], (d_model, d_model), jnp.float32),
        "bv": jnp.zeros((d_model,), jnp.float32),
        "wo": s * jax.random.normal(ks[3], (d_model, d_model), jnp.float32),
        "bo": jnp.zeros((d_model,), jnp.float32),
        "g1": jnp.ones((d_model,), jnp.float32),
        "be1": jnp.zeros((d_model,), jnp.float32),
        "w1": s * jax.random.normal(ks[4], (d_model, d_ff), jnp.float32),
        "b1": jnp.zeros((d_ff,), jnp.float32),
        "w2": s * jax.random.normal(ks[5], (d_ff, d_model), jnp.float32),
        "b2": jnp.zeros((d_model,), jnp.float32),
        "g2": jnp.ones((d_model,), jnp.float32),
        "be2": jnp.zeros((d_model,), jnp.float32),
    }


def pack_layer_params(layers, num_heads, matmul_dtype=jnp.bfloat16):
    """Stack per-layer params along a leading layer axis.  QKV weights are
    fused as (D, 3D) = [Wq*scale | Wk | Wv] (1/sqrt(dk) folded into Wq / bq),
    the output projection stays (D, D).  Matmul weights are bf16 (halves the
    weight DMA); biases / LayerNorm params stay f32."""
    D = layers[0]["wq"].shape[0]
    dk = D // num_heads
    scale = 1.0 / float(dk) ** 0.5

    def stack(fn):
        return jnp.stack([fn(p) for p in layers])

    return {
        "w_qkv": stack(lambda p: jnp.concatenate(
            [p["wq"] * scale, p["wk"], p["wv"]], axis=1)).astype(matmul_dtype),
        "b_qkv": stack(lambda p: jnp.concatenate(
            [p["bq"] * scale, p["bk"], p["bv"]]).reshape(1, 3 * D)),
        "wo": stack(lambda p: p["wo"]).astype(matmul_dtype),
        "bo": stack(lambda p: p["bo"].reshape(1, D)),
        "g1": stack(lambda p: p["g1"].reshape(1, D)),
        "be1": stack(lambda p: p["be1"].reshape(1, D)),
        "w1": stack(lambda p: p["w1"]).astype(matmul_dtype),
        "b1": stack(lambda p: p["b1"].reshape(1, -1)),
        "w2": stack(lambda p: p["w2"]).astype(matmul_dtype),
        "b2": stack(lambda p: p["b2"].reshape(1, D)),
        "g2": stack(lambda p: p["g2"].reshape(1, D)),
        "be2": stack(lambda p: p["be2"].reshape(1, D)),
    }


def encoder_forward(tokens, embedding, pos_enc, packed_params, num_heads,
                    batch_tile=None):
    # tokens: (B, S) int32
    B, S = tokens.shape
    x = jnp.take(embedding, tokens, axis=0)          # (B, S, D) embedding gather
    x = x + pos_enc[:, :S, :]                        # positional encoding
    return encoder_stack(x, packed_params, num_heads=num_heads,
                         batch_tile=batch_tile)


# ---------------------------------- main -------------------------------------

if __name__ == "__main__":
    d_model, num_heads, num_layers = 32, 4, 2
    max_seq_len, vocab_size, d_ff = 16, 50, 64
    B, S = 2, 8

    key = jax.random.PRNGKey(0)
    k_emb, k_tok, *k_layers = jax.random.split(key, 2 + num_layers)

    embedding = 0.02 * jax.random.normal(k_emb, (vocab_size, d_model), jnp.float32)
    pos_enc = get_pos_encoding(max_seq_len, d_model)
    layer_params = [init_layer_params(k, d_model, d_ff) for k in k_layers]
    packed = pack_layer_params(layer_params, num_heads)

    tokens = jax.random.randint(k_tok, (B, S), 0, vocab_size, dtype=jnp.int32)

    out = encoder_forward(tokens, embedding, pos_enc, packed, num_heads)
    jax.block_until_ready(out)
    assert out.shape == (B, S, d_model)
    print("KERNEL_OK")
</pallas_src>

<mosaic_0001>
module attributes {stable_mosaic.version = 11 : i64} {
  func.func @encoder_layer_kernel(%arg0: i32, %arg1: i32, %arg2: memref<16x32xf32, #tpu.memory_space<vmem>>, %arg3: memref<1x32x96xbf16, #tpu.memory_space<vmem>>, %arg4: memref<1x1x96xf32, #tpu.memory_space<vmem>>, %arg5: memref<1x32x32xbf16, #tpu.memory_space<vmem>>, %arg6: memref<1x1x32xf32, #tpu.memory_space<vmem>>, %arg7: memref<1x1x32xf32, #tpu.memory_space<vmem>>, %arg8: memref<1x1x32xf32, #tpu.memory_space<vmem>>, %arg9: memref<1x32x64xbf16, #tpu.memory_space<vmem>>, %arg10: memref<1x1x64xf32, #tpu.memory_space<vmem>>, %arg11: memref<1x64x32xbf16, #tpu.memory_space<vmem>>, %arg12: memref<1x1x32xf32, #tpu.memory_space<vmem>>, %arg13: memref<1x1x32xf32, #tpu.memory_space<vmem>>, %arg14: memref<1x1x32xf32, #tpu.memory_space<vmem>>, %arg15: memref<16x32xf32, #tpu.memory_space<vmem>>) attributes {dimension_semantics = [#tpu.dimension_semantics<parallel>, #tpu.dimension_semantics<arbitrary>], iteration_bounds = array<i64: 1, 2>, scalar_prefetch = 0 : i64, scratch_operands = 0 : i64, tpu.core_type = #tpu.core_type<tc>, window_params = [{transform_indices = @transform_0, window_bounds = array<i64: 16, 32>}, {transform_indices = @transform_1, window_bounds = array<i64: 1, 32, 96>}, {transform_indices = @transform_2, window_bounds = array<i64: 1, 1, 96>}, {transform_indices = @transform_3, window_bounds = array<i64: 1, 32, 32>}, {transform_indices = @transform_4, window_bounds = array<i64: 1, 1, 32>}, {transform_indices = @transform_5, window_bounds = array<i64: 1, 1, 32>}, {transform_indices = @transform_6, window_bounds = array<i64: 1, 1, 32>}, {transform_indices = @transform_7, window_bounds = array<i64: 1, 32, 64>}, {transform_indices = @transform_8, window_bounds = array<i64: 1, 1, 64>}, {transform_indices = @transform_9, window_bounds = array<i64: 1, 64, 32>}, {transform_indices = @transform_10, window_bounds = array<i64: 1, 1, 32>}, {transform_indices = @transform_11, window_bounds = array<i64: 1, 1, 32>}, {transform_indices = @transform_12, window_bounds = array<i64: 1, 1, 32>}, {transform_indices = @transform_13, window_bounds = array<i64: 16, 32>}]} {
    %c0_i32 = arith.constant 0 : i32
    %0 = arith.cmpi eq, %arg1, %c0_i32 : i32
    %1 = arith.extui %0 : i1 to i32
    %c0_i32_0 = arith.constant 0 : i32
    %2 = arith.cmpi ne, %1, %c0_i32_0 : i32
    scf.if %2 {
      %c0_70 = arith.constant 0 : index
      %c0_71 = arith.constant 0 : index
      %172 = vector.load %arg2[%c0_70, %c0_71] : memref<16x32xf32, #tpu.memory_space<vmem>>, vector<16x32xf32>
      %c0_72 = arith.constant 0 : index
      %c0_73 = arith.constant 0 : index
      %173 = vector.load %arg15[%c0_72, %c0_73] : memref<16x32xf32, #tpu.memory_space<vmem>>, vector<16x32xf32>
      tpu.vector_store %arg15[%c0_72, %c0_73], %172 {strides = array<i32>} : memref<16x32xf32, #tpu.memory_space<vmem>>, vector<16x32xf32>,
    } else {
    }
    %c0 = arith.constant 0 : index
    %c0_1 = arith.constant 0 : index
    %3 = vector.load %arg15[%c0, %c0_1] : memref<16x32xf32, #tpu.memory_space<vmem>>, vector<16x32xf32>
    %4 = arith.truncf %3 : vector<16x32xf32> to vector<16x32xbf16>
    %c0_2 = arith.constant 0 : index
    %c0_3 = arith.constant 0 : index
    %c0_4 = arith.constant 0 : index
    %5 = vector.load %arg3[%c0_2, %c0_3, %c0_4] : memref<1x32x96xbf16, #tpu.memory_space<vmem>>, vector<1x32x96xbf16>
    %6 = vector.shape_cast %5 : vector<1x32x96xbf16> to vector<32x96xbf16>
    %cst = arith.constant dense<0.000000e+00> : vector<16x96xf32>
    %7 = tpu.matmul %4, %6, %cst {dimension_numbers = #tpu.dot_dimension_numbers<[1], [0], [0], [1], [0, 0, 1, 1], [], []>} : vector<16x32xbf16>, vector<32x96xbf16>, vector<16x96xf32> -> vector<16x96xf32>
    %c0_5 = arith.constant 0 : index
    %c0_6 = arith.constant 0 : index
    %c0_7 = arith.constant 0 : index
    %8 = vector.load %arg4[%c0_5, %c0_6, %c0_7] : memref<1x1x96xf32, #tpu.memory_space<vmem>>, vector<1x1x96xf32>
    %9 = vector.shape_cast %8 : vector<1x1x96xf32> to vector<1x96xf32>
    %10 = vector.broadcast %9 : vector<1x96xf32> to vector<16x96xf32>
    %11 = arith.addf %7, %10 : vector<16x96xf32>
    %12 = vector.shape_cast %11 : vector<16x96xf32> to vector<2x8x96xf32>
    %13 = vector.extract_strided_slice %12 {offsets = [0, 0, 0], sizes = [2, 8, 8], strides = [1, 1, 1]} : vector<2x8x96xf32> to vector<2x8x8xf32>
    %14 = arith.truncf %13 : vector<2x8x8xf32> to vector<2x8x8xbf16>
    %15 = vector.extract_strided_slice %12 {offsets = [0, 0, 32], sizes = [2, 8, 8], strides = [1, 1, 1]} : vector<2x8x96xf32> to vector<2x8x8xf32>
    %16 = arith.truncf %15 : vector<2x8x8xf32> to vector<2x8x8xbf16>
    %17 = vector.extract_strided_slice %12 {offsets = [0, 0, 64], sizes = [2, 8, 8], strides = [1, 1, 1]} : vector<2x8x96xf32> to vector<2x8x8xf32>
    %18 = arith.truncf %17 : vector<2x8x8xf32> to vector<2x8x8xbf16>
    "tpu.trace_start"() <{level = 10 : i32, message = "bqd,bkd->bqk"}> : () -> ()
    %cst_8 = arith.constant dense<0.000000e+00> : vector<2x8x8xf32>
    %19 = tpu.matmul %14, %16, %cst_8 {dimension_numbers = #tpu.dot_dimension_numbers<[2], [2], [1], [1], [0, 0, 0, 1, 1, 1], [0], [0]>} : vector<2x8x8xbf16>, vector<2x8x8xbf16>, vector<2x8x8xf32> -> vector<2x8x8xf32>
    "tpu.trace_stop"() : () -> ()
    %cst_9 = arith.constant dense<0xFF800000> : vector<2x8xf32>
    %20 = vector.multi_reduction <maximumf>, %19, %cst_9 [2] : vector<2x8x8xf32> to vector<2x8xf32>
    %21 = vector.shape_cast %20 : vector<2x8xf32> to vector<2x8x1xf32>
    %22 = vector.broadcast %21 : vector<2x8x1xf32> to vector<2x8x8xf32>
    %23 = arith.subf %19, %22 : vector<2x8x8xf32>
    %24 = math.exp %23 : vector<2x8x8xf32>
    %cst_10 = arith.constant dense<0.000000e+00> : vector<2x8xf32>
    %25 = vector.multi_reduction <add>, %24, %cst_10 [2] : vector<2x8x8xf32> to vector<2x8xf32>
    %26 = vector.shape_cast %25 : vector<2x8xf32> to vector<2x8x1xf32>
    %27 = tpu.reciprocal %26 {approx = true} : vector<2x8x1xf32> -> vector<2x8x1xf32>
    %28 = vector.broadcast %27 : vector<2x8x1xf32> to vector<2x8x8xf32>
    %29 = arith.mulf %24, %28 : vector<2x8x8xf32>
    %30 = arith.truncf %29 : vector<2x8x8xf32> to vector<2x8x8xbf16>
    "tpu.trace_start"() <{level = 10 : i32, message = "bqk,bkd->bqd"}> : () -> ()
    %cst_11 = arith.constant dense<0.000000e+00> : vector<2x8x8xf32>
    %31 = tpu.matmul %30, %18, %cst_11 {dimension_numbers = #tpu.dot_dimension_numbers<[2], [1], [1], [2], [0, 0, 0, 1, 1, 2], [0], [0]>} : vector<2x8x8xbf16>, vector<2x8x8xbf16>, vector<2x8x8xf32> -> vector<2x8x8xf32>
    "tpu.trace_stop"() : () -> ()
    %32 = vector.extract_strided_slice %12 {offsets = [0, 0, 8], sizes = [2, 8, 8], strides = [1, 1, 1]} : vector<2x8x96xf32> to vector<2x8x8xf32>
    %33 = arith.truncf %32 : vector<2x8x8xf32> to vector<2x8x8xbf16>
    %34 = vector.extract_strided_slice %12 {offsets = [0, 0, 40], sizes = [2, 8, 8], strides = [1, 1, 1]} : vector<2x8x96xf32> to vector<2x8x8xf32>
    %35 = arith.truncf %34 : vector<2x8x8xf32> to vector<2x8x8xbf16>
    %36 = vector.extract_strided_slice %12 {offsets = [0, 0, 72], sizes = [2, 8, 8], strides = [1, 1, 1]} : vector<2x8x96xf32> to vector<2x8x8xf32>
    %37 = arith.truncf %36 : vector<2x8x8xf32> to vector<2x8x8xbf16>
    "tpu.trace_start"() <{level = 10 : i32, message = "bqd,bkd->bqk"}> : () -> ()
    %cst_12 = arith.constant dense<0.000000e+00> : vector<2x8x8xf32>
    %38 = tpu.matmul %33, %35, %cst_12 {dimension_numbers = #tpu.dot_dimension_numbers<[2], [2], [1], [1], [0, 0, 0, 1, 1, 1], [0], [0]>} : vector<2x8x8xbf16>, vector<2x8x8xbf16>, vector<2x8x8xf32> -> vector<2x8x8xf32>
    "tpu.trace_stop"() : () -> ()
    %cst_13 = arith.constant dense<0xFF800000> : vector<2x8xf32>
    %39 = vector.multi_reduction <maximumf>, %38, %cst_13 [2] : vector<2x8x8xf32> to vector<2x8xf32>
    %40 = vector.shape_cast %39 : vector<2x8xf32> to vector<2x8x1xf32>
    %41 = vector.broadcast %40 : vector<2x8x1xf32> to vector<2x8x8xf32>
    %42 = arith.subf %38, %41 : vector<2x8x8xf32>
    %43 = math.exp %42 : vector<2x8x8xf32>
    %cst_14 = arith.constant dense<0.000000e+00> : vector<2x8xf32>
    %44 = vector.multi_reduction <add>, %43, %cst_14 [2] : vector<2x8x8xf32> to vector<2x8xf32>
    %45 = vector.shape_cast %44 : vector<2x8xf32> to vector<2x8x1xf32>
    %46 = tpu.reciprocal %45 {approx = true} : vector<2x8x1xf32> -> vector<2x8x1xf32>
    %47 = vector.broadcast %46 : vector<2x8x1xf32> to vector<2x8x8xf32>
    %48 = arith.mulf %43, %47 : vector<2x8x8xf32>
    %49 = arith.truncf %48 : vector<2x8x8xf32> to vector<2x8x8xbf16>
    "tpu.trace_start"() <{level = 10 : i32, message = "bqk,bkd->bqd"}> : () -> ()
    %cst_15 = arith.constant dense<0.000000e+00> : vector<2x8x8xf32>
    %50 = tpu.matmul %49, %37, %cst_15 {dimension_numbers = #tpu.dot_dimension_numbers<[2], [1], [1], [2], [0, 0, 0, 1, 1, 2], [0], [0]>} : vector<2x8x8xbf16>, vector<2x8x8xbf16>, vector<2x8x8xf32> -> vector<2x8x8xf32>
    "tpu.trace_stop"() : () -> ()
    %51 = vector.extract_strided_slice %12 {offsets = [0, 0, 16], sizes = [2, 8, 8], strides = [1, 1, 1]} : vector<2x8x96xf32> to vector<2x8x8xf32>
    %52 = arith.truncf %51 : vector<2x8x8xf32> to vector<2x8x8xbf16>
    %53 = vector.extract_strided_slice %12 {offsets = [0, 0, 48], sizes = [2, 8, 8], strides = [1, 1, 1]} : vector<2x8x96xf32> to vector<2x8x8xf32>
    %54 = arith.truncf %53 : vector<2x8x8xf32> to vector<2x8x8xbf16>
    %55 = vector.extract_strided_slice %12 {offsets = [0, 0, 80], sizes = [2, 8, 8], strides = [1, 1, 1]} : vector<2x8x96xf32> to vector<2x8x8xf32>
    %56 = arith.truncf %55 : vector<2x8x8xf32> to vector<2x8x8xbf16>
    "tpu.trace_start"() <{level = 10 : i32, message = "bqd,bkd->bqk"}> : () -> ()
    %cst_16 = arith.constant dense<0.000000e+00> : vector<2x8x8xf32>
    %57 = tpu.matmul %52, %54, %cst_16 {dimension_numbers = #tpu.dot_dimension_numbers<[2], [2], [1], [1], [0, 0, 0, 1, 1, 1], [0], [0]>} : vector<2x8x8xbf16>, vector<2x8x8xbf16>, vector<2x8x8xf32> -> vector<2x8x8xf32>
    "tpu.trace_stop"() : () -> ()
    %cst_17 = arith.constant dense<0xFF800000> : vector<2x8xf32>
    %58 = vector.multi_reduction <maximumf>, %57, %cst_17 [2] : vector<2x8x8xf32> to vector<2x8xf32>
    %59 = vector.shape_cast %58 : vector<2x8xf32> to vector<2x8x1xf32>
    %60 = vector.broadcast %59 : vector<2x8x1xf32> to vector<2x8x8xf32>
    %61 = arith.subf %57, %60 : vector<2x8x8xf32>
    %62 = math.exp %61 : vector<2x8x8xf32>
    %cst_18 = arith.constant dense<0.000000e+00> : vector<2x8xf32>
    %63 = vector.multi_reduction <add>, %62, %cst_18 [2] : vector<2x8x8xf32> to vector<2x8xf32>
    %64 = vector.shape_cast %63 : vector<2x8xf32> to vector<2x8x1xf32>
    %65 = tpu.reciprocal %64 {approx = true} : vector<2x8x1xf32> -> vector<2x8x1xf32>
    %66 = vector.broadcast %65 : vector<2x8x1xf32> to vector<2x8x8xf32>
    %67 = arith.mulf %62, %66 : vector<2x8x8xf32>
    %68 = arith.truncf %67 : vector<2x8x8xf32> to vector<2x8x8xbf16>
    "tpu.trace_start"() <{level = 10 : i32, message = "bqk,bkd->bqd"}> : () -> ()
    %cst_19 = arith.constant dense<0.000000e+00> : vector<2x8x8xf32>
    %69 = tpu.matmul %68, %56, %cst_19 {dimension_numbers = #tpu.dot_dimension_numbers<[2], [1], [1], [2], [0, 0, 0, 1, 1, 2], [0], [0]>} : vector<2x8x8xbf16>, vector<2x8x8xbf16>, vector<2x8x8xf32> -> vector<2x8x8xf32>
    "tpu.trace_stop"() : () -> ()
    %70 = vector.extract_strided_slice %12 {offsets = [0, 0, 24], sizes = [2, 8, 8], strides = [1, 1, 1]} : vector<2x8x96xf32> to vector<2x8x8xf32>
    %71 = arith.truncf %70 : vector<2x8x8xf32> to vector<2x8x8xbf16>
    %72 = vector.extract_strided_slice %12 {offsets = [0, 0, 56], sizes = [2, 8, 8], strides = [1, 1, 1]} : vector<2x8x96xf32> to vector<2x8x8xf32>
    %73 = arith.truncf %72 : vector<2x8x8xf32> to vector<2x8x8xbf16>
    %74 = vector.extract_strided_slice %12 {offsets = [0, 0, 88], sizes = [2, 8, 8], strides = [1, 1, 1]} : vector<2x8x96xf32> to vector<2x8x8xf32>
    %75 = arith.truncf %74 : vector<2x8x8xf32> to vector<2x8x8xbf16>
    "tpu.trace_start"() <{level = 10 : i32, message = "bqd,bkd->bqk"}> : () -> ()
    %cst_20 = arith.constant dense<0.000000e+00> : vector<2x8x8xf32>
    %76 = tpu.matmul %71, %73, %cst_20 {dimension_numbers = #tpu.dot_dimension_numbers<[2], [2], [1], [1], [0, 0, 0, 1, 1, 1], [0], [0]>} : vector<2x8x8xbf16>, vector<2x8x8xbf16>, vector<2x8x8xf32> -> vector<2x8x8xf32>
    "tpu.trace_stop"() : () -> ()
    %cst_21 = arith.constant dense<0xFF800000> : vector<2x8xf32>
    %77 = vector.multi_reduction <maximumf>, %76, %cst_21 [2] : vector<2x8x8xf32> to vector<2x8xf32>
    %78 = vector.shape_cast %77 : vector<2x8xf32> to vector<2x8x1xf32>
    %79 = vector.broadcast %78 : vector<2x8x1xf32> to vector<2x8x8xf32>
    %80 = arith.subf %76, %79 : vector<2x8x8xf32>
    %81 = math.exp %80 : vector<2x8x8xf32>
    %cst_22 = arith.constant dense<0.000000e+00> : vector<2x8xf32>
    %82 = vector.multi_reduction <add>, %81, %cst_22 [2] : vector<2x8x8xf32> to vector<2x8xf32>
    %83 = vector.shape_cast %82 : vector<2x8xf32> to vector<2x8x1xf32>
    %84 = tpu.reciprocal %83 {approx = true} : vector<2x8x1xf32> -> vector<2x8x1xf32>
    %85 = vector.broadcast %84 : vector<2x8x1xf32> to vector<2x8x8xf32>
    %86 = arith.mulf %81, %85 : vector<2x8x8xf32>
    %87 = arith.truncf %86 : vector<2x8x8xf32> to vector<2x8x8xbf16>
    "tpu.trace_start"() <{level = 10 : i32, message = "bqk,bkd->bqd"}> : () -> ()
    %cst_23 = arith.constant dense<0.000000e+00> : vector<2x8x8xf32>
    %88 = tpu.matmul %87, %75, %cst_23 {dimension_numbers = #tpu.dot_dimension_numbers<[2], [1], [1], [2], [0, 0, 0, 1, 1, 2], [0], [0]>} : vector<2x8x8xbf16>, vector<2x8x8xbf16>, vector<2x8x8xf32> -> vector<2x8x8xf32>
    "tpu.trace_stop"() : () -> ()
    %89 = tpu.concatenate %31, %50, %69, %88 in 2 : vector<2x8x8xf32>, vector<2x8x8xf32>, vector<2x8x8xf32>, vector<2x8x8xf32> -> vector<2x8x32xf32>
    %90 = vector.shape_cast %89 : vector<2x8x32xf32> to vector<16x32xf32>
    %91 = arith.truncf %90 : vector<16x32xf32> to vector<16x32xbf16>
    %c0_24 = arith.constant 0 : index
    %c0_25 = arith.constant 0 : index
    %c0_26 = arith.constant 0 : index
    %92 = vector.load %arg5[%c0_24, %c0_25, %c0_26] : memref<1x32x32xbf16, #tpu.memory_space<vmem>>, vector<1x32x32xbf16>
    %93 = vector.shape_cast %92 : vector<1x32x32xbf16> to vector<32x32xbf16>
    %cst_27 = arith.constant dense<0.000000e+00> : vector<16x32xf32>
    %94 = tpu.matmul %91, %93, %cst_27 {dimension_numbers = #tpu.dot_dimension_numbers<[1], [0], [0], [1], [0, 0, 1, 1], [], []>} : vector<16x32xbf16>, vector<32x32xbf16>, vector<16x32xf32> -> vector<16x32xf32>
    %c0_28 = arith.constant 0 : index
    %c0_29 = arith.constant 0 : index
    %c0_30 = arith.constant 0 : index
    %95 = vector.load %arg6[%c0_28, %c0_29, %c0_30] : memref<1x1x32xf32, #tpu.memory_space<vmem>>, vector<1x1x32xf32>
    %96 = vector.shape_cast %95 : vector<1x1x32xf32> to vector<1x32xf32>
    %97 = vector.broadcast %96 : vector<1x32xf32> to vector<16x32xf32>
    %98 = arith.addf %94, %97 : vector<16x32xf32>
    %99 = arith.addf %3, %98 : vector<16x32xf32>
    %c0_31 = arith.constant 0 : index
    %c0_32 = arith.constant 0 : index
    %c0_33 = arith.constant 0 : index
    %100 = vector.load %arg7[%c0_31, %c0_32, %c0_33] : memref<1x1x32xf32, #tpu.memory_space<vmem>>, vector<1x1x32xf32>
    %101 = vector.shape_cast %100 : vector<1x1x32xf32> to vector<1x32xf32>
    %c0_34 = arith.constant 0 : index
    %c0_35 = arith.constant 0 : index
    %c0_36 = arith.constant 0 : index
    %102 = vector.load %arg8[%c0_34, %c0_35, %c0_36] : memref<1x1x32xf32, #tpu.memory_space<vmem>>, vector<1x1x32xf32>
    %103 = vector.shape_cast %102 : vector<1x1x32xf32> to vector<1x32xf32>
    %cst_37 = arith.constant dense<0.000000e+00> : vector<16xf32>
    %104 = vector.multi_reduction <add>, %99, %cst_37 [1] : vector<16x32xf32> to vector<16xf32>
    %105 = vector.shape_cast %104 : vector<16xf32> to vector<16x1xf32>
    %cst_38 = arith.constant 3.200000e+01 : f32
    %106 = vector.broadcast %cst_38 : f32 to vector<16x1xf32>
    %107 = arith.divf %105, %106 : vector<16x1xf32>
    %108 = vector.broadcast %107 : vector<16x1xf32> to vector<16x32xf32>
    %109 = arith.subf %99, %108 : vector<16x32xf32>
    %110 = arith.mulf %109, %109 : vector<16x32xf32>
    %cst_39 = arith.constant dense<0.000000e+00> : vector<16xf32>
    %111 = vector.multi_reduction <add>, %110, %cst_39 [1] : vector<16x32xf32> to vector<16xf32>
    %112 = vector.shape_cast %111 : vector<16xf32> to vector<16x1xf32>
    %cst_40 = arith.constant 3.200000e+01 : f32
    %113 = vector.broadcast %cst_40 : f32 to vector<16x1xf32>
    %114 = arith.divf %112, %113 : vector<16x1xf32>
    %115 = vector.broadcast %107 : vector<16x1xf32> to vector<16x32xf32>
    %116 = arith.subf %99, %115 : vector<16x32xf32>
    %cst_41 = arith.constant 9.99999974E-6 : f32
    %117 = vector.broadcast %cst_41 : f32 to vector<16x1xf32>
    %118 = arith.addf %114, %117 : vector<16x1xf32>
    %119 = math.rsqrt %118 : vector<16x1xf32>
    %120 = vector.broadcast %119 : vector<16x1xf32> to vector<16x32xf32>
    %121 = arith.mulf %116, %120 : vector<16x32xf32>
    %122 = vector.broadcast %101 : vector<1x32xf32> to vector<16x32xf32>
    %123 = arith.mulf %121, %122 : vector<16x32xf32>
    %124 = vector.broadcast %103 : vector<1x32xf32> to vector<16x32xf32>
    %125 = arith.addf %123, %124 : vector<16x32xf32>
    %126 = arith.truncf %125 : vector<16x32xf32> to vector<16x32xbf16>
    %c0_42 = arith.constant 0 : index
    %c0_43 = arith.constant 0 : index
    %c0_44 = arith.constant 0 : index
    %127 = vector.load %arg9[%c0_42, %c0_43, %c0_44] : memref<1x32x64xbf16, #tpu.memory_space<vmem>>, vector<1x32x64xbf16>
    %128 = vector.shape_cast %127 : vector<1x32x64xbf16> to vector<32x64xbf16>
    %cst_45 = arith.constant dense<0.000000e+00> : vector<16x64xf32>
    %129 = tpu.matmul %126, %128, %cst_45 {dimension_numbers = #tpu.dot_dimension_numbers<[1], [0], [0], [1], [0, 0, 1, 1], [], []>} : vector<16x32xbf16>, vector<32x64xbf16>, vector<16x64xf32> -> vector<16x64xf32>
    %c0_46 = arith.constant 0 : index
    %c0_47 = arith.constant 0 : index
    %c0_48 = arith.constant 0 : index
    %130 = vector.load %arg10[%c0_46, %c0_47, %c0_48] : memref<1x1x64xf32, #tpu.memory_space<vmem>>, vector<1x1x64xf32>
    %131 = vector.shape_cast %130 : vector<1x1x64xf32> to vector<1x64xf32>
    %132 = vector.broadcast %131 : vector<1x64xf32> to vector<16x64xf32>
    %133 = arith.addf %129, %132 : vector<16x64xf32>
    %cst_49 = arith.constant 0.000000e+00 : f32
    %134 = vector.broadcast %cst_49 : f32 to vector<16x64xf32>
    %135 = arith.maximumf %133, %134 : vector<16x64xf32>
    %136 = arith.truncf %135 : vector<16x64xf32> to vector<16x64xbf16>
    %c0_50 = arith.constant 0 : index
    %c0_51 = arith.constant 0 : index
    %c0_52 = arith.constant 0 : index
    %137 = vector.load %arg11[%c0_50, %c0_51, %c0_52] : memref<1x64x32xbf16, #tpu.memory_space<vmem>>, vector<1x64x32xbf16>
    %138 = vector.shape_cast %137 : vector<1x64x32xbf16> to vector<64x32xbf16>
    %cst_53 = arith.constant dense<0.000000e+00> : vector<16x32xf32>
    %139 = tpu.matmul %136, %138, %cst_53 {dimension_numbers = #tpu.dot_dimension_numbers<[1], [0], [0], [1], [0, 0, 1, 1], [], []>} : vector<16x64xbf16>, vector<64x32xbf16>, vector<16x32xf32> -> vector<16x32xf32>
    %c0_54 = arith.constant 0 : index
    %c0_55 = arith.constant 0 : index
    %c0_56 = arith.constant 0 : index
    %140 = vector.load %arg12[%c0_54, %c0_55, %c0_56] : memref<1x1x32xf32, #tpu.memory_space<vmem>>, vector<1x1x32xf32>
    %141 = vector.shape_cast %140 : vector<1x1x32xf32> to vector<1x32xf32>
    %142 = vector.broadcast %141 : vector<1x32xf32> to vector<16x32xf32>
    %143 = arith.addf %139, %142 : vector<16x32xf32>
    %144 = arith.addf %125, %143 : vector<16x32xf32>
    %c0_57 = arith.constant 0 : index
    %c0_58 = arith.constant 0 : index
    %c0_59 = arith.constant 0 : index
    %145 = vector.load %arg13[%c0_57, %c0_58, %c0_59] : memref<1x1x32xf32, #tpu.memory_space<vmem>>, vector<1x1x32xf32>
    %146 = vector.shape_cast %145 : vector<1x1x32xf32> to vector<1x32xf32>
    %c0_60 = arith.constant 0 : index
    %c0_61 = arith.constant 0 : index
    %c0_62 = arith.constant 0 : index
    %147 = vector.load %arg14[%c0_60, %c0_61, %c0_62] : memref<1x1x32xf32, #tpu.memory_space<vmem>>, vector<1x1x32xf32>
    %148 = vector.shape_cast %147 : vector<1x1x32xf32> to vector<1x32xf32>
    %cst_63 = arith.constant dense<0.000000e+00> : vector<16xf32>
    %149 = vector.multi_reduction <add>, %144, %cst_63 [1] : vector<16x32xf32> to vector<16xf32>
    %150 = vector.shape_cast %149 : vector<16xf32> to vector<16x1xf32>
    %cst_64 = arith.constant 3.200000e+01 : f32
    %151 = vector.broadcast %cst_64 : f32 to vector<16x1xf32>
    %152 = arith.divf %150, %151 : vector<16x1xf32>
    %153 = vector.broadcast %152 : vector<16x1xf32> to vector<16x32xf32>
    %154 = arith.subf %144, %153 : vector<16x32xf32>
    %155 = arith.mulf %154, %154 : vector<16x32xf32>
    %cst_65 = arith.constant dense<0.000000e+00> : vector<16xf32>
    %156 = vector.multi_reduction <add>, %155, %cst_65 [1] : vector<16x32xf32> to vector<16xf32>
    %157 = vector.shape_cast %156 : vector<16xf32> to vector<16x1xf32>
    %cst_66 = arith.constant 3.200000e+01 : f32
    %158 = vector.broadcast %cst_66 : f32 to vector<16x1xf32>
    %159 = arith.divf %157, %158 : vector<16x1xf32>
    %160 = vector.broadcast %152 : vector<16x1xf32> to vector<16x32xf32>
    %161 = arith.subf %144, %160 : vector<16x32xf32>
    %cst_67 = arith.constant 9.99999974E-6 : f32
    %162 = vector.broadcast %cst_67 : f32 to vector<16x1xf32>
    %163 = arith.addf %159, %162 : vector<16x1xf32>
    %164 = math.rsqrt %163 : vector<16x1xf32>
    %165 = vector.broadcast %164 : vector<16x1xf32> to vector<16x32xf32>
    %166 = arith.mulf %161, %165 : vector<16x32xf32>
    %167 = vector.broadcast %146 : vector<1x32xf32> to vector<16x32xf32>
    %168 = arith.mulf %166, %167 : vector<16x32xf32>
    %169 = vector.broadcast %148 : vector<1x32xf32> to vector<16x32xf32>
    %170 = arith.addf %168, %169 : vector<16x32xf32>
    %c0_68 = arith.constant 0 : index
    %c0_69 = arith.constant 0 : index
    %171 = vector.load %arg15[%c0_68, %c0_69] : memref<16x32xf32, #tpu.memory_space<vmem>>, vector<16x32xf32>
    tpu.vector_store %arg15[%c0_68, %c0_69], %170 {strides = array<i32>} : memref<16x32xf32, #tpu.memory_space<vmem>>, vector<16x32xf32>,
    return
  }
  func.func @transform_0(%arg0: i32, %arg1: i32) -> (i32, i32) {
    %c0_i32 = arith.constant 0 : i32
    %c0_i32_0 = arith.constant 0 : i32
    return %arg0, %c0_i32 : i32, i32
  }
  func.func @transform_1(%arg0: i32, %arg1: i32) -> (i32, i32, i32) {
    %c0_i32 = arith.constant 0 : i32
    %c0_i32_0 = arith.constant 0 : i32
    %c0_i32_1 = arith.constant 0 : i32
    return %arg1, %c0_i32, %c0_i32_0 : i32, i32, i32
  }
  func.func @transform_2(%arg0: i32, %arg1: i32) -> (i32, i32, i32) {
    %c0_i32 = arith.constant 0 : i32
    %c0_i32_0 = arith.constant 0 : i32
    %c0_i32_1 = arith.constant 0 : i32
    return %arg1, %c0_i32, %c0_i32_0 : i32, i32, i32
  }
  func.func @transform_3(%arg0: i32, %arg1: i32) -> (i32, i32, i32) {
    %c0_i32 = arith.constant 0 : i32
    %c0_i32_0 = arith.constant 0 : i32
    %c0_i32_1 = arith.constant 0 : i32
    return %arg1, %c0_i32, %c0_i32_0 : i32, i32, i32
  }
  func.func @transform_4(%arg0: i32, %arg1: i32) -> (i32, i32, i32) {
    %c0_i32 = arith.constant 0 : i32
    %c0_i32_0 = arith.constant 0 : i32
    %c0_i32_1 = arith.constant 0 : i32
    return %arg1, %c0_i32, %c0_i32_0 : i32, i32, i32
  }
  func.func @transform_5(%arg0: i32, %arg1: i32) -> (i32, i32, i32) {
    %c0_i32 = arith.constant 0 : i32
    %c0_i32_0 = arith.constant 0 : i32
    %c0_i32_1 = arith.constant 0 : i32
    return %arg1, %c0_i32, %c0_i32_0 : i32, i32, i32
  }
  func.func @transform_6(%arg0: i32, %arg1: i32) -> (i32, i32, i32) {
    %c0_i32 = arith.constant 0 : i32
    %c0_i32_0 = arith.constant 0 : i32
    %c0_i32_1 = arith.constant 0 : i32
    return %arg1, %c0_i32, %c0_i32_0 : i32, i32, i32
  }
  func.func @transform_7(%arg0: i32, %arg1: i32) -> (i32, i32, i32) {
    %c0_i32 = arith.constant 0 : i32
    %c0_i32_0 = arith.constant 0 : i32
    %c0_i32_1 = arith.constant 0 : i32
    return %arg1, %c0_i32, %c0_i32_0 : i32, i32, i32
  }
  func.func @transform_8(%arg0: i32, %arg1: i32) -> (i32, i32, i32) {
    %c0_i32 = arith.constant 0 : i32
    %c0_i32_0 = arith.constant 0 : i32
    %c0_i32_1 = arith.constant 0 : i32
    return %arg1, %c0_i32, %c0_i32_0 : i32, i32, i32
  }
  func.func @transform_9(%arg0: i32, %arg1: i32) -> (i32, i32, i32) {
    %c0_i32 = arith.constant 0 : i32
    %c0_i32_0 = arith.constant 0 : i32
    %c0_i32_1 = arith.constant 0 : i32
    return %arg1, %c0_i32, %c0_i32_0 : i32, i32, i32
  }
  func.func @transform_10(%arg0: i32, %arg1: i32) -> (i32, i32, i32) {
    %c0_i32 = arith.constant 0 : i32
    %c0_i32_0 = arith.constant 0 : i32
    %c0_i32_1 = arith.constant 0 : i32
    return %arg1, %c0_i32, %c0_i32_0 : i32, i32, i32
  }
  func.func @transform_11(%arg0: i32, %arg1: i32) -> (i32, i32, i32) {
    %c0_i32 = arith.constant 0 : i32
    %c0_i32_0 = arith.constant 0 : i32
    %c0_i32_1 = arith.constant 0 : i32
    return %arg1, %c0_i32, %c0_i32_0 : i32, i32, i32
  }
  func.func @transform_12(%arg0: i32, %arg1: i32) -> (i32, i32, i32) {
    %c0_i32 = arith.constant 0 : i32
    %c0_i32_0 = arith.constant 0 : i32
    %c0_i32_1 = arith.constant 0 : i32
    return %arg1, %c0_i32, %c0_i32_0 : i32, i32, i32
  }
  func.func @transform_13(%arg0: i32, %arg1: i32) -> (i32, i32) {
    %c0_i32 = arith.constant 0 : i32
    %c0_i32_0 = arith.constant 0 : i32
    return %arg0, %c0_i32 : i32, i32
  }
}

</mosaic_0001>

<llo_original>
// kernel: tpu_custom_call.1
$region0: #{tpu_custom_call.1}
  #allocation0 [shape = 'u32[]', space=smem, size = 0x4, offset = 0x4, fixed_abs, tag = 'smem constant byte address 0x4 - core index']
  #allocation1 [shape = 'u32[72,128]{1,0:T(1,128)}', space=vmem, size = 0x9000, scoped, tag = 'internal scratch']
  %s0 = inlined_call_operand.hbm [shape: f32[16,32], index: 0, kind: input, shape index: {}, may-alias: {0,13}]
  %s1 = inlined_call_operand.vmem [shape: bf16[2,32,96], index: 1, kind: input, shape index: {}]
  %s2 = inlined_call_operand.vmem [shape: f32[2,1,96], index: 2, kind: input, shape index: {}]
  %s3 = inlined_call_operand.vmem [shape: bf16[2,32,32], index: 3, kind: input, shape index: {}]
  %s4 = inlined_call_operand.vmem [shape: f32[2,1,32], index: 4, kind: input, shape index: {}]
  %s5 = inlined_call_operand.vmem [shape: f32[2,1,32], index: 5, kind: input, shape index: {}]
  %s6 = inlined_call_operand.vmem [shape: f32[2,1,32], index: 6, kind: input, shape index: {}]
  %s7 = inlined_call_operand.vmem [shape: bf16[2,32,64], index: 7, kind: input, shape index: {}]
  %s8 = inlined_call_operand.hbm [shape: f32[2,1,64], index: 8, kind: input, shape index: {}]
  %s9 = inlined_call_operand.vmem [shape: bf16[2,64,32], index: 9, kind: input, shape index: {}]
  %s10 = inlined_call_operand.hbm [shape: f32[2,1,32], index: 10, kind: input, shape index: {}]
  %s11 = inlined_call_operand.hbm [shape: f32[2,1,32], index: 11, kind: input, shape index: {}]
  %s12 = inlined_call_operand.vmem [shape: f32[2,1,32], index: 12, kind: input, shape index: {}]
  %s13 = inlined_call_operand.hbm [shape: f32[16,32], index: 13, kind: output, shape index: {}, may-alias: {0,13}]
  %s14 = sld [smem:[#allocation0]]
  $region105: #{tpu_custom_call.1} parent=0
    _
  %s16 = ssub.s32 1, %s14
  %s17 = scalar_select 0, %s16, %s14
  $region1: #{tpu_custom_call.1} parent=0
    #allocation2 [shape = 'u8[8192]{0}', space=vmem, size = 0x2000, scoped, tag = 'input window, operand 0, single buffered']
    #allocation3 [shape = 's32[2]{0}', space=sflag, size = 0x8, scoped, tag = 'scoped memory for tpu_custom_call.1']
    #allocation4 [shape = 's32[2]{0}', space=sflag, size = 0x8, scoped, tag = 'scoped memory for tpu_custom_call.1']
    #allocation5 [shape = 'u8[1024]{0}', space=vmem, size = 0x400, scoped, tag = 'input window, operand 8']
    #allocation6 [shape = 's32[2]{0}', space=sflag, size = 0x8, scoped, tag = 'scoped memory for tpu_custom_call.1']
    #allocation7 [shape = 'u8[1024]{0}', space=vmem, size = 0x400, scoped, tag = 'input window, operand 10']
    #allocation8 [shape = 'u8[1024]{0}', space=vmem, size = 0x400, scoped, tag = 'input window, operand 11']
    #allocation9 [shape = 's32[2]{0}', space=sflag, size = 0x8, scoped, tag = 'scoped memory for tpu_custom_call.1']
    #allocation10 [shape = 'u8[8192]{0}', space=vmem, size = 0x2000, scoped, tag = 'output window, operand 0, single buffered']
    %18 = vsyncpa [#allocation3], 0
    %19 = vsyncpa [#allocation6], 0
    %s20 = scalar_lea.sflag [#allocation6], 1
    %21 = vsyncpa %s20, 0
    %22 = vsyncpa [#allocation9], 0
    %s23 = scalar_lea.sflag [#allocation9], 1
    %24 = vsyncpa %s23, 0
    %25 = vsyncpa [#allocation4], 0
    loop: start=0, step=1, limit=4
    $region2: #{tpu_custom_call.1} parent=1 // loop_pre_header
      _
    $region3: #{tpu_custom_call.1} parent=1 // loop_header
      %s27 = sphi 0, %s31
      %p28 = scmp.ge.s32.totalorder %s27, 4
      %s34 = sphi 0, %s46
      %s35 = sphi 0, %s42
      %s36 = sphi 0, %s34
      %s37 = sphi 0, %s35
      %s38 = sphi 0, %s36
      %s39 = sphi 0, %s37
      %s49 = sphi 0, %s51
      %s52 = sphi 0, %s49
      %s53 = sphi 0, %s52
      %s69 = sphi 0, %s53
      %s75 = sphi 0, %s77
      %s78 = sphi 0, %s75
      %s79 = sphi 0, %s78
      %s95 = sphi 0, %s79
      %s101 = sphi 0, %s103
      %s104 = sphi 0, %s101
      %s105 = sphi 0, %s104
      %s121 = sphi 0, %s105
      %s127 = sphi 0, %s129
      %s130 = sphi 0, %s127
      %s131 = sphi 0, %s130
      %s147 = sphi 0, %s131
      %s153 = sphi 0, %s155
      %s156 = sphi 0, %s153
      %s157 = sphi 0, %s156
      %s173 = sphi 0, %s157
      %s179 = sphi 0, %s181
      %s182 = sphi 0, %s179
      %s183 = sphi 0, %s182
      %s199 = sphi 0, %s183
      %s205 = sphi 0, %s207
      %s208 = sphi 0, %s205
      %s209 = sphi 0, %s208
      %s225 = sphi 0, %s209
      %s231 = sphi 0, %s233
      %s234 = sphi 0, %s231
      %s235 = sphi 0, %s234
      %s251 = sphi 0, %s235
      %s257 = sphi 0, %s259
      %s260 = sphi 0, %s257
      %s261 = sphi 0, %s260
      %s277 = sphi 0, %s261
      %s283 = sphi 0, %s285
      %s286 = sphi 0, %s283
      %s287 = sphi 0, %s286
      %s303 = sphi 0, %s287
      %s309 = sphi 0, %s311
      %s312 = sphi 0, %s309
      %s313 = sphi 0, %s312
      %s329 = sphi 0, %s313
      %s335 = sphi 0, %s337
      %s338 = sphi 0, %s335
      %s339 = sphi 0, %s338
      %s355 = sphi 0, %s339
      %s361 = sphi 0, %s363
      %s364 = sphi 0, %s361
      %s365 = sphi 0, %s364
      %s381 = sphi 0, %s365
      %s387 = sphi 0, %s389
      %s390 = sphi 0, %s387
      %s391 = sphi 0, %s390
      %s407 = sphi 0, %s391
    $region4: #{tpu_custom_call.1} parent=1 // loop_header_branch
      %30 = sbr.rel (%p28) target = $region8
    $region5: #{tpu_custom_call.1} parent=1 // loop_body
      %s32 = ssub.s32 %s27, 1
      %s33 = ssub.s32 %s27, 2
      %s40 = sadd.s32 1, %s35
      %p41 = scmp.ge.s32.totalorder %s40, 2
      %s42 = scalar_select %p41, 0, %s40
      %s43 = sadd.s32 1, %s34
      %s44 = scalar_select %p41, %s43, %s34
      %p45 = scmp.ge.s32.totalorder %s44, 1
      %s46 = scalar_select %p45, 0, %s44
      %s47 = ssub.s32 %s34, %s46
      %p48 = scmp.eq.s32.totalorder %s47, 0
      %s50 = sadd.s32 %s49, 1
      %s51 = scalar_select %p48, %s49, %s50
      %p54 = pneg %p48
      %p55 = scmp.eq.s32.totalorder %s27, 1
      %p56 = por %p54, %p55
      %p57 = scmp.ne.s32.totalorder %s49, %s52
      %p58 = scmp.eq.s32.totalorder %s27, 0
      %p59 = por %p57, %p58
      %p60 = scmp.ne.s32.totalorder %s49, %s52
      %p61 = scmp.eq.s32.totalorder %s32, 1
      %p62 = por %p60, %p61
      %p63 = scmp.ne.s32.totalorder %s52, %s53
      %p64 = scmp.eq.s32.totalorder %s32, 0
      %p65 = por %p63, %p64
      %p66 = scmp.ne.s32.totalorder %s52, %s53
      %p67 = scmp.eq.s32.totalorder %s33, 1
      %p68 = por %p66, %p67
      %p70 = scmp.ne.s32.totalorder %s53, %s69
      %p71 = scmp.eq.s32.totalorder %s33, 0
      %p72 = por %p70, %p71
      %s73 = ssub.s32 %s35, %s42
      %p74 = scmp.eq.s32.totalorder %s73, 0
      %s76 = sadd.s32 %s75, 1
      %s77 = scalar_select %p74, %s75, %s76
      %p80 = pneg %p74
      %p81 = scmp.eq.s32.totalorder %s27, 1
      %p82 = por %p80, %p81
      %p83 = scmp.ne.s32.totalorder %s75, %s78
      %p84 = scmp.eq.s32.totalorder %s27, 0
      %p85 = por %p83, %p84
      %p86 = scmp.ne.s32.totalorder %s75, %s78
      %p87 = scmp.eq.s32.totalorder %s32, 1
      %p88 = por %p86, %p87
      %p89 = scmp.ne.s32.totalorder %s78, %s79
      %p90 = scmp.eq.s32.totalorder %s32, 0
      %p91 = por %p89, %p90
      %p92 = scmp.ne.s32.totalorder %s78, %s79
      %p93 = scmp.eq.s32.totalorder %s33, 1
      %p94 = por %p92, %p93
      %p96 = scmp.ne.s32.totalorder %s79, %s95
      %p97 = scmp.eq.s32.totalorder %s33, 0
      %p98 = por %p96, %p97
      %s99 = ssub.s32 %s35, %s42
      %p100 = scmp.eq.s32.totalorder %s99, 0
      %s102 = sadd.s32 %s101, 1
      %s103 = scalar_select %p100, %s101, %s102
      %p106 = pneg %p100
      %p107 = scmp.eq.s32.totalorder %s27, 1
      %p108 = por %p106, %p107
      %p109 = scmp.ne.s32.totalorder %s101, %s104
      %p110 = scmp.eq.s32.totalorder %s27, 0
      %p111 = por %p109, %p110
      %p112 = scmp.ne.s32.totalorder %s101, %s104
      %p113 = scmp.eq.s32.totalorder %s32, 1
      %p114 = por %p112, %p113
      %p115 = scmp.ne.s32.totalorder %s104, %s105
      %p116 = scmp.eq.s32.totalorder %s32, 0
      %p117 = por %p115, %p116
      %p118 = scmp.ne.s32.totalorder %s104, %s105
      %p119 = scmp.eq.s32.totalorder %s33, 1
      %p120 = por %p118, %p119
      %p122 = scmp.ne.s32.totalorder %s105, %s121
      %p123 = scmp.eq.s32.totalorder %s33, 0
      %p124 = por %p122, %p123
      %s125 = ssub.s32 %s35, %s42
      %p126 = scmp.eq.s32.totalorder %s125, 0
      %s128 = sadd.s32 %s127, 1
      %s129 = scalar_select %p126, %s127, %s128
      %p132 = pneg %p126
      %p133 = scmp.eq.s32.totalorder %s27, 1
      %p134 = por %p132, %p133
      %p135 = scmp.ne.s32.totalorder %s127, %s130
      %p136 = scmp.eq.s32.totalorder %s27, 0
      %p137 = por %p135, %p136
      %p138 = scmp.ne.s32.totalorder %s127, %s130
      %p139 = scmp.eq.s32.totalorder %s32, 1
      %p140 = por %p138, %p139
      %p141 = scmp.ne.s32.totalorder %s130, %s131
      %p142 = scmp.eq.s32.totalorder %s32, 0
      %p143 = por %p141, %p142
      %p144 = scmp.ne.s32.totalorder %s130, %s131
      %p145 = scmp.eq.s32.totalorder %s33, 1
      %p146 = por %p144, %p145
      %p148 = scmp.ne.s32.totalorder %s131, %s147
      %p149 = scmp.eq.s32.totalorder %s33, 0
      %p150 = por %p148, %p149
      %s151 = ssub.s32 %s35, %s42
      %p152 = scmp.eq.s32.totalorder %s151, 0
      %s154 = sadd.s32 %s153, 1
      %s155 = scalar_select %p152, %s153, %s154
      %p158 = pneg %p152
      %p159 = scmp.eq.s32.totalorder %s27, 1
      %p160 = por %p158, %p159
      %p161 = scmp.ne.s32.totalorder %s153, %s156
      %p162 = scmp.eq.s32.totalorder %s27, 0
      %p163 = por %p161, %p162
      %p164 = scmp.ne.s32.totalorder %s153, %s156
      %p165 = scmp.eq.s32.totalorder %s32, 1
      %p166 = por %p164, %p165
      %p167 = scmp.ne.s32.totalorder %s156, %s157
      %p168 = scmp.eq.s32.totalorder %s32, 0
      %p169 = por %p167, %p168
      %p170 = scmp.ne.s32.totalorder %s156, %s157
      %p171 = scmp.eq.s32.totalorder %s33, 1
      %p172 = por %p170, %p171
      %p174 = scmp.ne.s32.totalorder %s157, %s173
      %p175 = scmp.eq.s32.totalorder %s33, 0
      %p176 = por %p174, %p175
      %s177 = ssub.s32 %s35, %s42
      %p178 = scmp.eq.s32.totalorder %s177, 0
      %s180 = sadd.s32 %s179, 1
      %s181 = scalar_select %p178, %s179, %s180
      %p184 = pneg %p178
      %p185 = scmp.eq.s32.totalorder %s27, 1
      %p186 = por %p184, %p185
      %p187 = scmp.ne.s32.totalorder %s179, %s182
      %p188 = scmp.eq.s32.totalorder %s27, 0
      %p189 = por %p187, %p188
      %p190 = scmp.ne.s32.totalorder %s179, %s182
      %p191 = scmp.eq.s32.totalorder %s32, 1
      %p192 = por %p190, %p191
      %p193 = scmp.ne.s32.totalorder %s182, %s183
      %p194 = scmp.eq.s32.totalorder %s32, 0
      %p195 = por %p193, %p194
      %p196 = scmp.ne.s32.totalorder %s182, %s183
      %p197 = scmp.eq.s32.totalorder %s33, 1
      %p198 = por %p196, %p197
      %p200 = scmp.ne.s32.totalorder %s183, %s199
      %p201 = scmp.eq.s32.totalorder %s33, 0
      %p202 = por %p200, %p201
      %s203 = ssub.s32 %s35, %s42
      %p204 = scmp.eq.s32.totalorder %s203, 0
      %s206 = sadd.s32 %s205, 1
      %s207 = scalar_select %p204, %s205, %s206
      %p210 = pneg %p204
      %p211 = scmp.eq.s32.totalorder %s27, 1
      %p212 = por %p210, %p211
      %p213 = scmp.ne.s32.totalorder %s205, %s208
      %p214 = scmp.eq.s32.totalorder %s27, 0
      %p215 = por %p213, %p214
      %p216 = scmp.ne.s32.totalorder %s205, %s208
      %p217 = scmp.eq.s32.totalorder %s32, 1
      %p218 = por %p216, %p217
      %p219 = scmp.ne.s32.totalorder %s208, %s209
      %p220 = scmp.eq.s32.totalorder %s32, 0
      %p221 = por %p219, %p220
      %p222 = scmp.ne.s32.totalorder %s208, %s209
      %p223 = scmp.eq.s32.totalorder %s33, 1
      %p224 = por %p222, %p223
      %p226 = scmp.ne.s32.totalorder %s209, %s225
      %p227 = scmp.eq.s32.totalorder %s33, 0
      %p228 = por %p226, %p227
      %s229 = ssub.s32 %s35, %s42
      %p230 = scmp.eq.s32.totalorder %s229, 0
      %s232 = sadd.s32 %s231, 1
      %s233 = scalar_select %p230, %s231, %s232
      %p236 = pneg %p230
      %p237 = scmp.eq.s32.totalorder %s27, 1
      %p238 = por %p236, %p237
      %p239 = scmp.ne.s32.totalorder %s231, %s234
      %p240 = scmp.eq.s32.totalorder %s27, 0
      %p241 = por %p239, %p240
      %p242 = scmp.ne.s32.totalorder %s231, %s234
      %p243 = scmp.eq.s32.totalorder %s32, 1
      %p244 = por %p242, %p243
      %p245 = scmp.ne.s32.totalorder %s234, %s235
      %p246 = scmp.eq.s32.totalorder %s32, 0
      %p247 = por %p245, %p246
      %p248 = scmp.ne.s32.totalorder %s234, %s235
      %p249 = scmp.eq.s32.totalorder %s33, 1
      %p250 = por %p248, %p249
      %p252 = scmp.ne.s32.totalorder %s235, %s251
      %p253 = scmp.eq.s32.totalorder %s33, 0
      %p254 = por %p252, %p253
      %s255 = ssub.s32 %s35, %s42
      %p256 = scmp.eq.s32.totalorder %s255, 0
      %s258 = sadd.s32 %s257, 1
      %s259 = scalar_select %p256, %s257, %s258
      %p262 = pneg %p256
      %p263 = scmp.eq.s32.totalorder %s27, 1
      %p264 = por %p262, %p263
      %p265 = scmp.ne.s32.totalorder %s257, %s260
      %p266 = scmp.eq.s32.totalorder %s27, 0
      %p267 = por %p265, %p266
      %p268 = scmp.ne.s32.totalorder %s257, %s260
      %p269 = scmp.eq.s32.totalorder %s32, 1
      %p270 = por %p268, %p269
      %p271 = scmp.ne.s32.totalorder %s260, %s261
      %p272 = scmp.eq.s32.totalorder %s32, 0
      %p273 = por %p271, %p272
      %p274 = scmp.ne.s32.totalorder %s260, %s261
      %p275 = scmp.eq.s32.totalorder %s33, 1
      %p276 = por %p274, %p275
      %p278 = scmp.ne.s32.totalorder %s261, %s277
      %p279 = scmp.eq.s32.totalorder %s33, 0
      %p280 = por %p278, %p279
      %s281 = ssub.s32 %s35, %s42
      %p282 = scmp.eq.s32.totalorder %s281, 0
      %s284 = sadd.s32 %s283, 1
      %s285 = scalar_select %p282, %s283, %s284
      %p288 = pneg %p282
      %p289 = scmp.eq.s32.totalorder %s27, 1
      %p290 = por %p288, %p289
      %p291 = scmp.ne.s32.totalorder %s283, %s286
      %p292 = scmp.eq.s32.totalorder %s27, 0
      %p293 = por %p291, %p292
      %p294 = scmp.ne.s32.totalorder %s283, %s286
      %p295 = scmp.eq.s32.totalorder %s32, 1
      %p296 = por %p294, %p295
      %p297 = scmp.ne.s32.totalorder %s286, %s287
      %p298 = scmp.eq.s32.totalorder %s32, 0
      %p299 = por %p297, %p298
      %p300 = scmp.ne.s32.totalorder %s286, %s287
      %p301 = scmp.eq.s32.totalorder %s33, 1
      %p302 = por %p300, %p301
      %p304 = scmp.ne.s32.totalorder %s287, %s303
      %p305 = scmp.eq.s32.totalorder %s33, 0
      %p306 = por %p304, %p305
      %s307 = ssub.s32 %s35, %s42
      %p308 = scmp.eq.s32.totalorder %s307, 0
      %s310 = sadd.s32 %s309, 1
      %s311 = scalar_select %p308, %s309, %s310
      %p314 = pneg %p308
      %p315 = scmp.eq.s32.totalorder %s27, 1
      %p316 = por %p314, %p315
      %p317 = scmp.ne.s32.totalorder %s309, %s312
      %p318 = scmp.eq.s32.totalorder %s27, 0
      %p319 = por %p317, %p318
      %p320 = scmp.ne.s32.totalorder %s309, %s312
      %p321 = scmp.eq.s32.totalorder %s32, 1
      %p322 = por %p320, %p321
      %p323 = scmp.ne.s32.totalorder %s312, %s313
      %p324 = scmp.eq.s32.totalorder %s32, 0
      %p325 = por %p323, %p324
      %p326 = scmp.ne.s32.totalorder %s312, %s313
      %p327 = scmp.eq.s32.totalorder %s33, 1
      %p328 = por %p326, %p327
      %p330 = scmp.ne.s32.totalorder %s313, %s329
      %p331 = scmp.eq.s32.totalorder %s33, 0
      %p332 = por %p330, %p331
      %s333 = ssub.s32 %s35, %s42
      %p334 = scmp.eq.s32.totalorder %s333, 0
      %s336 = sadd.s32 %s335, 1
      %s337 = scalar_select %p334, %s335, %s336
      %p340 = pneg %p334
      %p341 = scmp.eq.s32.totalorder %s27, 1
      %p342 = por %p340, %p341
      %p343 = scmp.ne.s32.totalorder %s335, %s338
      %p344 = scmp.eq.s32.totalorder %s27, 0
      %p345 = por %p343, %p344
      %p346 = scmp.ne.s32.totalorder %s335, %s338
      %p347 = scmp.eq.s32.totalorder %s32, 1
      %p348 = por %p346, %p347
      %p349 = scmp.ne.s32.totalorder %s338, %s339
      %p350 = scmp.eq.s32.totalorder %s32, 0
      %p351 = por %p349, %p350
      %p352 = scmp.ne.s32.totalorder %s338, %s339
      %p353 = scmp.eq.s32.totalorder %s33, 1
      %p354 = por %p352, %p353
      %p356 = scmp.ne.s32.totalorder %s339, %s355
      %p357 = scmp.eq.s32.totalorder %s33, 0
      %p358 = por %p356, %p357
      %s359 = ssub.s32 %s35, %s42
      %p360 = scmp.eq.s32.totalorder %s359, 0
      %s362 = sadd.s32 %s361, 1
      %s363 = scalar_select %p360, %s361, %s362
      %p366 = pneg %p360
      %p367 = scmp.eq.s32.totalorder %s27, 1
      %p368 = por %p366, %p367
      %p369 = scmp.ne.s32.totalorder %s361, %s364
      %p370 = scmp.eq.s32.totalorder %s27, 0
      %p371 = por %p369, %p370
      %p372 = scmp.ne.s32.totalorder %s361, %s364
      %p373 = scmp.eq.s32.totalorder %s32, 1
      %p374 = por %p372, %p373
      %p375 = scmp.ne.s32.totalorder %s364, %s365
      %p376 = scmp.eq.s32.totalorder %s32, 0
      %p377 = por %p375, %p376
      %p378 = scmp.ne.s32.totalorder %s364, %s365
      %p379 = scmp.eq.s32.totalorder %s33, 1
      %p380 = por %p378, %p379
      %p382 = scmp.ne.s32.totalorder %s365, %s381
      %p383 = scmp.eq.s32.totalorder %s33, 0
      %p384 = por %p382, %p383
      %s385 = ssub.s32 %s34, %s46
      %p386 = scmp.eq.s32.totalorder %s385, 0
      %s388 = sadd.s32 %s387, 1
      %s389 = scalar_select %p386, %s387, %s388
      %p392 = pneg %p386
      %p393 = scmp.eq.s32.totalorder %s27, 1
      %p394 = por %p392, %p393
      %p395 = scmp.ne.s32.totalorder %s387, %s390
      %p396 = scmp.eq.s32.totalorder %s27, 0
      %p397 = por %p395, %p396
      %p398 = scmp.ne.s32.totalorder %s387, %s390
      %p399 = scmp.eq.s32.totalorder %s32, 1
      %p400 = por %p398, %p399
      %p401 = scmp.ne.s32.totalorder %s390, %s391
      %p402 = scmp.eq.s32.totalorder %s32, 0
      %p403 = por %p401, %p402
      %p404 = scmp.ne.s32.totalorder %s390, %s391
      %p405 = scmp.eq.s32.totalorder %s33, 1
      %p406 = por %p404, %p405
      %p408 = scmp.ne.s32.totalorder %s391, %s407
      %p409 = scmp.eq.s32.totalorder %s33, 0
      %p410 = por %p408, %p409
      %p411 = scmp.le.s32.totalorder 1, %s27
      %p412 = scmp.lt.s32.totalorder %s27, 3
      %p413 = pnand %p411, %p412
      %p414 = pneg %p413
      // Predicated region
      $region9: #{tpu_custom_call.1} parent=5 // pred_check
        _
      $region10: #{tpu_custom_call.1} parent=5 // pred_check_branch
        %416 = sbr.rel (%p413) target = $region12
      $region11: #{tpu_custom_call.1} parent=5 // pred_region
        %s417 = ssub.s32 %s27, 1
        // Predicated region
        $region13: #{tpu_custom_call.1} parent=11 // pred_check
          %p418 = pneg %p65
        $region14: #{tpu_custom_call.1} parent=11 // pred_check_branch
          %420 = sbr.rel (%p418) target = $region16
        $region15: #{tpu_custom_call.1} parent=11 // pred_region
          %s421 = smul.u32 2, %s36
          %423 = vsyncadd [#allocation3], 0
          %s424 = smul.addr %s421, 8
          %s425 = scalar_lea.hbm %s0, %s424
          %s426 = sshll.u32 %s425, 4
          %s427 = int_to_ptr.hbm [resolvable:$true] %s426
          %s428 = sshll.u32 [#allocation2], 4
          %s429 = int_to_ptr.vmem [resolvable:$true] %s428
          %434 = dma.hbm_to_vmem [thread:$0]  %s427, 256, %s429, [#allocation3], 128, 128, 8
        $region16: #{tpu_custom_call.1} parent=11 // pred_fallthru
          _
      $region12: #{tpu_custom_call.1} parent=5 // pred_fallthru
        _
      %p435 = scmp.lt.s32.totalorder %s27, 2
      // Predicated region
      $region17: #{tpu_custom_call.1} parent=5 // pred_check
        %p436 = pneg %p435
      $region18: #{tpu_custom_call.1} parent=5 // pred_check_branch
        %438 = sbr.rel (%p436) target = $region20
      $region19: #{tpu_custom_call.1} parent=5 // pred_region
        // Predicated region
        $region21: #{tpu_custom_call.1} parent=19 // pred_check
          %p439 = pneg %p85
        $region22: #{tpu_custom_call.1} parent=19 // pred_check_branch
          %441 = sbr.rel (%p439) target = $region24
        $region23: #{tpu_custom_call.1} parent=19 // pred_region
          %p442 = scmp.lt.s32.totalorder %s35, 1
          %s443 = scalar_select %p442, %s35, 1
          %s444 = smul.addr %s443, 4
          %s445 = smul.addr %s444, 4
          %s446 = scalar_lea.vmem %s1, %s445
        $region24: #{tpu_custom_call.1} parent=19 // pred_fallthru
          _
        // Predicated region
        $region25: #{tpu_custom_call.1} parent=19 // pred_check
          %p447 = pneg %p111
        $region26: #{tpu_custom_call.1} parent=19 // pred_check_branch
          %449 = sbr.rel (%p447) target = $region28
        $region27: #{tpu_custom_call.1} parent=19 // pred_region
          %p450 = scmp.lt.s32.totalorder %s35, 1
          %s451 = scalar_select %p450, %s35, 1
          %s452 = scalar_lea.vmem %s2, %s451
        $region28: #{tpu_custom_call.1} parent=19 // pred_fallthru
          _
        // Predicated region
        $region29: #{tpu_custom_call.1} parent=19 // pred_check
          %p453 = pneg %p137
        $region30: #{tpu_custom_call.1} parent=19 // pred_check_branch
          %455 = sbr.rel (%p453) target = $region32
        $region31: #{tpu_custom_call.1} parent=19 // pred_region
          %p456 = scmp.lt.s32.totalorder %s35, 1
          %s457 = scalar_select %p456, %s35, 1
          %s458 = smul.addr %s457, 4
          %s459 = smul.addr %s458, 4
          %s460 = scalar_lea.vmem %s3, %s459
        $region32: #{tpu_custom_call.1} parent=19 // pred_fallthru
          _
        // Predicated region
        $region33: #{tpu_custom_call.1} parent=19 // pred_check
          %p461 = pneg %p163
        $region34: #{tpu_custom_call.1} parent=19 // pred_check_branch
          %463 = sbr.rel (%p461) target = $region36
        $region35: #{tpu_custom_call.1} parent=19 // pred_region
          %p464 = scmp.lt.s32.totalorder %s35, 1
          %s465 = scalar_select %p464, %s35, 1
          %s466 = scalar_lea.vmem %s4, %s465
        $region36: #{tpu_custom_call.1} parent=19 // pred_fallthru
          _
        // Predicated region
        $region37: #{tpu_custom_call.1} parent=19 // pred_check
          %p467 = pneg %p189
        $region38: #{tpu_custom_call.1} parent=19 // pred_check_branch
          %469 = sbr.rel (%p467) target = $region40
        $region39: #{tpu_custom_call.1} parent=19 // pred_region
          %p470 = scmp.lt.s32.totalorder %s35, 1
          %s471 = scalar_select %p470, %s35, 1
          %s472 = scalar_lea.vmem %s5, %s471
        $region40: #{tpu_custom_call.1} parent=19 // pred_fallthru
          _
        // Predicated region
        $region41: #{tpu_custom_call.1} parent=19 // pred_check
          %p473 = pneg %p215
        $region42: #{tpu_custom_call.1} parent=19 // pred_check_branch
          %475 = sbr.rel (%p473) target = $region44
        $region43: #{tpu_custom_call.1} parent=19 // pred_region
          %p476 = scmp.lt.s32.totalorder %s35, 1
          %s477 = scalar_select %p476, %s35, 1
          %s478 = scalar_lea.vmem %s6, %s477
        $region44: #{tpu_custom_call.1} parent=19 // pred_fallthru
          _
        // Predicated region
        $region45: #{tpu_custom_call.1} parent=19 // pred_check
          %p479 = pneg %p241
        $region46: #{tpu_custom_call.1} parent=19 // pred_check_branch
          %481 = sbr.rel (%p479) target = $region48
        $region47: #{tpu_custom_call.1} parent=19 // pred_region
          %p482 = scmp.lt.s32.totalorder %s35, 1
          %s483 = scalar_select %p482, %s35, 1
          %s484 = smul.addr %s483, 4
          %s485 = smul.addr %s484, 4
          %s486 = scalar_lea.vmem %s7, %s485
        $region48: #{tpu_custom_call.1} parent=19 // pred_fallthru
          _
        // Predicated region
        $region49: #{tpu_custom_call.1} parent=19 // pred_check
          %p487 = pneg %p267
        $region50: #{tpu_custom_call.1} parent=19 // pred_check_branch
          %489 = sbr.rel (%p487) target = $region52
        $region51: #{tpu_custom_call.1} parent=19 // pred_region
          %s490 = sand.u32 %s27, 1
          %s491 = scalar_lea.sflag [#allocation6], %s490
          %s492 = sand.u32 %s257, 1
          %s493 = scalar_lea.vmem [#allocation5], %s492
          %495 = vsyncadd %s491, 0
          %s496 = scalar_lea.hbm %s8, %s35
          %s498 = sshll.u32 %s496, 4
          %s499 = int_to_ptr.hbm [resolvable:$true] %s498
          %s500 = sshll.u32 %s493, 4
          %s501 = int_to_ptr.vmem [resolvable:$true] %s500
          %503 = dma.hbm_to_vmem [thread:$0]  %s499, 16, %s501, %s491
        $region52: #{tpu_custom_call.1} parent=19 // pred_fallthru
          _
        // Predicated region
        $region53: #{tpu_custom_call.1} parent=19 // pred_check
          %p504 = pneg %p293
        $region54: #{tpu_custom_call.1} parent=19 // pred_check_branch
          %506 = sbr.rel (%p504) target = $region56
        $region55: #{tpu_custom_call.1} parent=19 // pred_region
          %p507 = scmp.lt.s32.totalorder %s35, 1
          %s508 = scalar_select %p507, %s35, 1
          %s509 = smul.addr %s508, 8
          %s510 = smul.addr %s509, 4
          %s511 = scalar_lea.vmem %s9, %s510
        $region56: #{tpu_custom_call.1} parent=19 // pred_fallthru
          _
        // Predicated region
        $region57: #{tpu_custom_call.1} parent=19 // pred_check
          %p512 = pneg %p319
        $region58: #{tpu_custom_call.1} parent=19 // pred_check_branch
          %514 = sbr.rel (%p512) target = $region60
        $region59: #{tpu_custom_call.1} parent=19 // pred_region
          %s515 = sand.u32 %s27, 1
          %s516 = scalar_lea.sflag [#allocation6], %s515
          %s517 = sand.u32 %s309, 1
          %s518 = scalar_lea.vmem [#allocation7], %s517
          %520 = vsyncadd %s516, 0
          %s521 = scalar_lea.hbm %s10, %s35
          %s523 = sshll.u32 %s521, 4
          %s524 = int_to_ptr.hbm [resolvable:$true] %s523
          %s525 = sshll.u32 %s518, 4
          %s526 = int_to_ptr.vmem [resolvable:$true] %s525
          %528 = dma.hbm_to_vmem [thread:$0]  %s524, 16, %s526, %s516
        $region60: #{tpu_custom_call.1} parent=19 // pred_fallthru
          _
        // Predicated region
        $region61: #{tpu_custom_call.1} parent=19 // pred_check
          %p529 = pneg %p345
        $region62: #{tpu_custom_call.1} parent=19 // pred_check_branch
          %531 = sbr.rel (%p529) target = $region64
        $region63: #{tpu_custom_call.1} parent=19 // pred_region
          %s532 = sand.u32 %s335, 1
          %s533 = scalar_lea.sflag [#allocation9], %s532
          %s534 = sand.u32 %s335, 1
          %s535 = scalar_lea.vmem [#allocation8], %s534
          %537 = vsyncadd %s533, 0
          %s538 = scalar_lea.hbm %s11, %s35
          %s540 = sshll.u32 %s538, 4
          %s541 = int_to_ptr.hbm [resolvable:$true] %s540
          %s542 = sshll.u32 %s535, 4
          %s543 = int_to_ptr.vmem [resolvable:$true] %s542
          %545 = dma.hbm_to_vmem [thread:$0]  %s541, 16, %s543, %s533
        $region64: #{tpu_custom_call.1} parent=19 // pred_fallthru
          _
        // Predicated region
        $region65: #{tpu_custom_call.1} parent=19 // pred_check
          %p546 = pneg %p371
        $region66: #{tpu_custom_call.1} parent=19 // pred_check_branch
          %548 = sbr.rel (%p546) target = $region68
        $region67: #{tpu_custom_call.1} parent=19 // pred_region
          %p549 = scmp.lt.s32.totalorder %s35, 1
          %s550 = scalar_select %p549, %s35, 1
          %s551 = scalar_lea.vmem %s12, %s550
        $region68: #{tpu_custom_call.1} parent=19 // pred_fallthru
          _
      $region20: #{tpu_custom_call.1} parent=5 // pred_fallthru
        _
      %p552 = scmp.le.s32.totalorder 1, %s27
      %p553 = scmp.lt.s32.totalorder %s27, 3
      %p554 = pnand %p552, %p553
      %p555 = pneg %p554
      // Predicated region
      $region69: #{tpu_custom_call.1} parent=5 // pred_check
        _
      $region70: #{tpu_custom_call.1} parent=5 // pred_check_branch
        %557 = sbr.rel (%p554) target = $region72
      $region71: #{tpu_custom_call.1} parent=5 // pred_region
        %s558 = ssub.s32 %s27, 1
        // Predicated region
        $region73: #{tpu_custom_call.1} parent=71 // pred_check
          %p559 = pneg %p65
        $region74: #{tpu_custom_call.1} parent=71 // pred_check_branch
          %561 = sbr.rel (%p559) target = $region76
        $region75: #{tpu_custom_call.1} parent=71 // pred_region
          %563 = dma.done [#allocation3], 256
        $region76: #{tpu_custom_call.1} parent=71 // pred_fallthru
          _
        %s564 = sand.u32 %s32, 1
        %s565 = scalar_lea.sflag [#allocation6], %s564
        %s566 = sand.u32 %s260, 1
        %s567 = scalar_lea.vmem [#allocation5], %s566
        // Predicated region
        $region77: #{tpu_custom_call.1} parent=71 // pred_check
          %p568 = pneg %p273
        $region78: #{tpu_custom_call.1} parent=71 // pred_check_branch
          %570 = sbr.rel (%p568) target = $region80
        $region79: #{tpu_custom_call.1} parent=71 // pred_region
          %572 = dma.done %s565, 16
        $region80: #{tpu_custom_call.1} parent=71 // pred_fallthru
          _
        %s573 = sand.u32 %s32, 1
        %s574 = scalar_lea.sflag [#allocation6], %s573
        %s575 = sand.u32 %s312, 1
        %s576 = scalar_lea.vmem [#allocation7], %s575
        // Predicated region
        $region81: #{tpu_custom_call.1} parent=71 // pred_check
          %p577 = pneg %p325
        $region82: #{tpu_custom_call.1} parent=71 // pred_check_branch
          %579 = sbr.rel (%p577) target = $region84
        $region83: #{tpu_custom_call.1} parent=71 // pred_region
          %581 = dma.done %s574, 16
        $region84: #{tpu_custom_call.1} parent=71 // pred_fallthru
          _
        %s582 = sand.u32 %s338, 1
        %s583 = scalar_lea.sflag [#allocation9], %s582
        %s584 = sand.u32 %s338, 1
        %s585 = scalar_lea.vmem [#allocation8], %s584
        // Predicated region
        $region85: #{tpu_custom_call.1} parent=71 // pred_check
          %p586 = pneg %p351
        $region86: #{tpu_custom_call.1} parent=71 // pred_check_branch
          %588 = sbr.rel (%p586) target = $region88
        $region87: #{tpu_custom_call.1} parent=71 // pred_region
          %590 = dma.done %s583, 16
        $region88: #{tpu_custom_call.1} parent=71 // pred_fallthru
          _
        %p591 = pneg %p65
        %p592 = pneg %p62
        %p593 = scmp.lt.s32.totalorder %s37, 1
        %s594 = scalar_select %p593, %s37, 1
        %s595 = smul.addr %s594, 4
        %s596 = smul.addr %s595, 4
        %s597 = scalar_lea.vmem %s1, %s596
        %p598 = pneg %p91
        %p599 = pneg %p88
        %p600 = scmp.lt.s32.totalorder %s37, 1
        %s601 = scalar_select %p600, %s37, 1
        %s602 = scalar_lea.vmem %s2, %s601
        %p603 = pneg %p117
        %p604 = pneg %p114
        %p605 = scmp.lt.s32.totalorder %s37, 1
        %s606 = scalar_select %p605, %s37, 1
        %s607 = smul.addr %s606, 4
        %s608 = smul.addr %s607, 4
        %s609 = scalar_lea.vmem %s3, %s608
        %p610 = pneg %p143
        %p611 = pneg %p140
        %p612 = scmp.lt.s32.totalorder %s37, 1
        %s613 = scalar_select %p612, %s37, 1
        %s614 = scalar_lea.vmem %s4, %s613
        %p615 = pneg %p169
        %p616 = pneg %p166
        %p617 = scmp.lt.s32.totalorder %s37, 1
        %s618 = scalar_select %p617, %s37, 1
        %s619 = scalar_lea.vmem %s5, %s618
        %p620 = pneg %p195
        %p621 = pneg %p192
        %p622 = scmp.lt.s32.totalorder %s37, 1
        %s623 = scalar_select %p622, %s37, 1
        %s624 = scalar_lea.vmem %s6, %s623
        %p625 = pneg %p221
        %p626 = pneg %p218
        %p627 = scmp.lt.s32.totalorder %s37, 1
        %s628 = scalar_select %p627, %s37, 1
        %s629 = smul.addr %s628, 4
        %s630 = smul.addr %s629, 4
        %s631 = scalar_lea.vmem %s7, %s630
        %p632 = pneg %p247
        %p633 = pneg %p244
        %s634 = sand.u32 %s32, 1
        %s635 = scalar_lea.sflag [#allocation6], %s634
        %s636 = sand.u32 %s260, 1
        %s637 = scalar_lea.vmem [#allocation5], %s636
        %p638 = pneg %p273
        %p639 = pneg %p270
        %p640 = scmp.lt.s32.totalorder %s37, 1
        %s641 = scalar_select %p640, %s37, 1
        %s642 = smul.addr %s641, 8
        %s643 = smul.addr %s642, 4
        %s644 = scalar_lea.vmem %s9, %s643
        %p645 = pneg %p299
        %p646 = pneg %p296
        %s647 = sand.u32 %s32, 1
        %s648 = scalar_lea.sflag [#allocation6], %s647
        %s649 = sand.u32 %s312, 1
        %s650 = scalar_lea.vmem [#allocation7], %s649
        %p651 = pneg %p325
        %p652 = pneg %p322
        %s653 = sand.u32 %s338, 1
        %s654 = scalar_lea.sflag [#allocation9], %s653
        %s655 = sand.u32 %s338, 1
        %s656 = scalar_lea.vmem [#allocation8], %s655
        %p657 = pneg %p351
        %p658 = pneg %p348
        %p659 = scmp.lt.s32.totalorder %s37, 1
        %s660 = scalar_select %p659, %s37, 1
        %s661 = scalar_lea.vmem %s12, %s660
        %p662 = pneg %p377
        %p663 = pneg %p374
        %p664 = pneg %p403
        %p665 = pneg %p400
        %s666 = smul.u32 2, %s36
        %p667 = scmp.lt.s32.totalorder %s37, 1
        %s668 = scalar_select %p667, %s37, 1
        %s669 = smul.addr %s668, 4
        %s670 = smul.addr %s669, 4
        %s671 = scalar_lea.vmem %s1, %s670
        %p672 = scmp.lt.s32.totalorder %s37, 1
        %s673 = scalar_select %p672, %s37, 1
        %s674 = scalar_lea.vmem %s2, %s673
        %p675 = scmp.lt.s32.totalorder %s37, 1
        %s676 = scalar_select %p675, %s37, 1
        %s677 = smul.addr %s676, 4
        %s678 = smul.addr %s677, 4
        %s679 = scalar_lea.vmem %s3, %s678
        %p680 = scmp.lt.s32.totalorder %s37, 1
        %s681 = scalar_select %p680, %s37, 1
        %s682 = scalar_lea.vmem %s4, %s681
        %p683 = scmp.lt.s32.totalorder %s37, 1
        %s684 = scalar_select %p683, %s37, 1
        %s685 = scalar_lea.vmem %s5, %s684
        %p686 = scmp.lt.s32.totalorder %s37, 1
        %s687 = scalar_select %p686, %s37, 1
        %s688 = scalar_lea.vmem %s6, %s687
        %p689 = scmp.lt.s32.totalorder %s37, 1
        %s690 = scalar_select %p689, %s37, 1
        %s691 = smul.addr %s690, 4
        %s692 = smul.addr %s691, 4
        %s693 = scalar_lea.vmem %s7, %s692
        %p694 = scmp.lt.s32.totalorder %s37, 1
        %s695 = scalar_select %p694, %s37, 1
        %s696 = smul.addr %s695, 8
        %s697 = smul.addr %s696, 4
        %s698 = scalar_lea.vmem %s9, %s697
        %p699 = scmp.lt.s32.totalorder %s37, 1
        %s700 = scalar_select %p699, %s37, 1
        %s701 = scalar_lea.vmem %s12, %s700
        %s702 = smul.u32 2, %s36
        %p704 = scmp.eq.s32.totalorder %s37, 0
        // Predicated region
        $region89: #{tpu_custom_call.1} parent=71 // pred_check
          %p705 = pneg %p704
        $region90: #{tpu_custom_call.1} parent=71 // pred_check_branch
          %707 = sbr.rel (%p705) target = $region92
        $region91: #{tpu_custom_call.1} parent=71 // pred_region
          %v708 = vld [vmem:[#allocation2] sm:$0xff]
          %v709 = vld [vmem:[#allocation2 + $0x8] sm:$0xff]
          %vm710 = vcmask 261120
          %711 = vst.msk [vmem:[#allocation10] sm:$0xff] %vm710, %v708
          %712 = vst.msk [vmem:[#allocation10 + $0x8] sm:$0xff] %vm710, %v709
        $region92: #{tpu_custom_call.1} parent=71 // pred_fallthru
          _
        %v713 = vld [vmem:[#allocation10] sm:$0xff]
        %v714 = vld [vmem:[#allocation10 + $0x8] sm:$0xff]
        %v715 = vpack.c.bf16 %v714, %v713
        %v716 = vld [vmem:[%s671] sm:$0xf]
        %v717 = vld [vmem:[%s671 + $0x4] sm:$0xf]
        %v718 = vld [vmem:[%s671 + $0x8] sm:$0xf]
        %v719 = vld [vmem:[%s671 + $0xc] sm:$0xf]
        %v720 = vld [vmem:[%s674] sm:$0x1]
        %v722 = vperm.slane %v720, 0
        %v728 = vunpack.c.l.b16 %v716
        %v729 = vunpack.c.l.b16 %v717
        %v730 = vunpack.c.l.b16 %v718
        %v731 = vunpack.c.l.b16 %v719
        %v732 = vpack.c.b16 %v729, %v728
        %v733 = vpack.c.b16 %v731, %v730
        %vm736 = vcmask 261120
        %v738 = vsel %vm736, %v715, 0
        %740 = vmatpush.bf16.msra.mxu0 0
        %741 = vmatpush.bf16.msra.mxu0 0
        %742 = vmatpush.bf16.msra.mxu0 0
        %743 = vmatpush.bf16.msra.mxu0 0
        %744 = vmatpush.bf16.msra.mxu0 0
        %745 = vmatpush.bf16.msra.mxu0 0
        %746 = vmatpush.bf16.msra.mxu0 %v733
        %747 = vmatpush.bf16.msra.mxu0 %v732
        %748 = vmatmul.bf16.gmra.mxu0 %v738
        %v749 = vpop.f32.mrf.mxu0
        %v750 = vadd.f32 %v722, %v749
        %v751 = vpop.f32.mrf.mxu0
        %v752 = vadd.f32 %v722, %v751
        %753 = vdwg.mxu0
        %v754 = vpack.c.bf16 %v750, %v750
        %v755 = vpack.c.bf16 %v752, %v752
        %v757 = vunpack.c.l.b16 %v754
        %v758 = vpack.c.b16 %v757, %v757
        %759 = vrot.lane.b32.xlu0 %v758, 96
        %v760 = vpop.permute.xlu0 %759
        %vm761 = vcmask 64512
        %v763 = vsel %vm761, %v754, 0
        %v766 = vsel %vm761, %v760, 0
        %768 = vmatpush.bf16.xpose.msra.mxu0 0
        %769 = vmatpush.bf16.xpose.msra.mxu0 0
        %770 = vmatpush.bf16.xpose.msra.mxu0 0
        %771 = vmatpush.bf16.xpose.msra.mxu0 0
        %772 = vmatpush.bf16.xpose.msra.mxu0 0
        %773 = vmatpush.bf16.xpose.msra.mxu0 0
        %774 = vmatpush.bf16.xpose.msra.mxu0 0
        %775 = vmatpush.bf16.xpose.msra.mxu0 %v766
        %776 = vmatmul.bf16.gmra.mxu0 %v763
        %v777 = vpop.f32.mrf.mxu0
        %v778 = vadd.f32 0.0, %v777
        %v779 = vpop.f32.mrf.mxu0
        %780 = vdwg.mxu0
        %v782 = vunpack.c.l.b16 %v755
        %v783 = vpack.c.b16 %v782, %v782
        %784 = vrot.lane.b32.xlu0 %v783, 96
        %v785 = vpop.permute.xlu0 %784
        %v787 = vsel %vm761, %v755, 0
        %v790 = vsel %vm761, %v785, 0
        %792 = vmatpush.bf16.xpose.msra.mxu0 0
        %793 = vmatpush.bf16.xpose.msra.mxu0 0
        %794 = vmatpush.bf16.xpose.msra.mxu0 0
        %795 = vmatpush.bf16.xpose.msra.mxu0 0
        %796 = vmatpush.bf16.xpose.msra.mxu0 0
        %797 = vmatpush.bf16.xpose.msra.mxu0 0
        %798 = vmatpush.bf16.xpose.msra.mxu0 0
        %799 = vmatpush.bf16.xpose.msra.mxu0 %v790
        %800 = vmatmul.bf16.gmra.mxu0 %v787
        %v801 = vpop.f32.mrf.mxu0
        %v802 = vadd.f32 0.0, %v801
        %v803 = vpop.f32.mrf.mxu0
        %804 = vdwg.mxu0
        %v805 = vsel %vm761, %v778, -inf
        %806 = vmax.xlane.f32.xlu0 %v805
        %v807 = vpop.xlane.xlu0 %806
        %v808 = vsel %vm761, %v802, -inf
        %809 = vmax.xlane.f32.xlu0 %v808
        %v810 = vpop.xlane.xlu0 %809
        %v811 = vsub.f32 %v778, %v807
        %v812 = vsub.f32 %v802, %v810
        %v813 = vmul.f32 %v811, 1.442695
        %v814 = vpow.pop %v813
        %v815 = vmul.f32 %v812, 1.442695
        %v816 = vpow.pop %v815
        %v817 = vsel %vm761, %v814, 0.0
        %818 = vadd.xlane.f32.xlu0 %v817
        %v819 = vpop.xlane.xlu0 %818
        %v820 = vsel %vm761, %v816, 0.0
        %821 = vadd.xlane.f32.xlu0 %v820
        %v822 = vpop.xlane.xlu0 %821
        %v823 = vrcp.pop %v819
        %v824 = vrcp.pop %v822
        %v825 = vmul.f32 %v814, %v823
        %v826 = vmul.f32 %v816, %v824
        %v827 = vpack.c.bf16 %v825, %v825
        %v828 = vpack.c.bf16 %v826, %v826
        %829 = vrot.lane.b32.xlu0 %v758, 64
        %v830 = vpop.permute.xlu0 %829
        %v832 = vsel %vm761, %v827, 0
        %vm834 = vcmask 1043456
        %v836 = vsel %vm834, %v830, 0
        %838 = vmatpush.bf16.msra.mxu0 0
        %839 = vmatpush.bf16.msra.mxu0 0
        %840 = vmatpush.bf16.msra.mxu0 0
        %841 = vmatpush.bf16.msra.mxu0 0
        %842 = vmatpush.bf16.msra.mxu0 0
        %843 = vmatpush.bf16.msra.mxu0 0
        %844 = vmatpush.bf16.msra.mxu0 0
        %845 = vmatpush.bf16.msra.mxu0 %v836
        %846 = vmatmul.bf16.gmra.mxu0 %v832
        %v847 = vpop.f32.mrf.mxu0
        %v848 = vadd.f32 0.0, %v847
        %v849 = vpop.f32.mrf.mxu0
        %850 = vdwg.mxu0
        %851 = vrot.lane.b32.xlu0 %v783, 64
        %v852 = vpop.permute.xlu0 %851
        %v854 = vsel %vm761, %v828, 0
        %v857 = vsel %vm834, %v852, 0
        %859 = vmatpush.bf16.msra.mxu0 0
        %860 = vmatpush.bf16.msra.mxu0 0
        %861 = vmatpush.bf16.msra.mxu0 0
        %862 = vmatpush.bf16.msra.mxu0 0
        %863 = vmatpush.bf16.msra.mxu0 0
        %864 = vmatpush.bf16.msra.mxu0 0
        %865 = vmatpush.bf16.msra.mxu0 0
        %866 = vmatpush.bf16.msra.mxu0 %v857
        %867 = vmatmul.bf16.gmra.mxu0 %v854
        %v868 = vpop.f32.mrf.mxu0
        %v869 = vadd.f32 0.0, %v868
        %v870 = vpop.f32.mrf.mxu0
        %871 = vdwg.mxu0
        %872 = vrot.lane.b32.xlu0 %v758, 120
        %v873 = vpop.permute.xlu0 %872
        %874 = vrot.lane.b32.xlu0 %v758, 88
        %v875 = vpop.permute.xlu0 %874
        %v877 = vsel %vm761, %v873, 0
        %v880 = vsel %vm761, %v875, 0
        %882 = vmatpush.bf16.xpose.msra.mxu0 0
        %883 = vmatpush.bf16.xpose.msra.mxu0 0
        %884 = vmatpush.bf16.xpose.msra.mxu0 0
        %885 = vmatpush.bf16.xpose.msra.mxu0 0
        %886 = vmatpush.bf16.xpose.msra.mxu0 0
        %887 = vmatpush.bf16.xpose.msra.mxu0 0
        %888 = vmatpush.bf16.xpose.msra.mxu0 0
        %889 = vmatpush.bf16.xpose.msra.mxu0 %v880
        %890 = vmatmul.bf16.gmra.mxu0 %v877
        %v891 = vpop.f32.mrf.mxu0
        %v892 = vadd.f32 0.0, %v891
        %v893 = vpop.f32.mrf.mxu0
        %894 = vdwg.mxu0
        %895 = vrot.lane.b32.xlu0 %v783, 120
        %v896 = vpop.permute.xlu0 %895
        %897 = vrot.lane.b32.xlu0 %v783, 88
        %v898 = vpop.permute.xlu0 %897
        %v900 = vsel %vm761, %v896, 0
        %v903 = vsel %vm761, %v898, 0
        %905 = vmatpush.bf16.xpose.msra.mxu0 0
        %906 = vmatpush.bf16.xpose.msra.mxu0 0
        %907 = vmatpush.bf16.xpose.msra.mxu0 0
        %908 = vmatpush.bf16.xpose.msra.mxu0 0
        %909 = vmatpush.bf16.xpose.msra.mxu0 0
        %910 = vmatpush.bf16.xpose.msra.mxu0 0
        %911 = vmatpush.bf16.xpose.msra.mxu0 0
        %912 = vmatpush.bf16.xpose.msra.mxu0 %v903
        %913 = vmatmul.bf16.gmra.mxu0 %v900
        %v914 = vpop.f32.mrf.mxu0
        %v915 = vadd.f32 0.0, %v914
        %v916 = vpop.f32.mrf.mxu0
        %917 = vdwg.mxu0
        %v918 = vsel %vm761, %v892, -inf
        %919 = vmax.xlane.f32.xlu0 %v918
        %v920 = vpop.xlane.xlu0 %919
        %v921 = vsel %vm761, %v915, -inf
        %922 = vmax.xlane.f32.xlu0 %v921
        %v923 = vpop.xlane.xlu0 %922
        %v924 = vsub.f32 %v892, %v920
        %v925 = vsub.f32 %v915, %v923
        %v926 = vmul.f32 %v924, 1.442695
        %v927 = vpow.pop %v926
        %v928 = vmul.f32 %v925, 1.442695
        %v929 = vpow.pop %v928
        %v930 = vsel %vm761, %v927, 0.0
        %931 = vadd.xlane.f32.xlu0 %v930
        %v932 = vpop.xlane.xlu0 %931
        %v933 = vsel %vm761, %v929, 0.0
        %934 = vadd.xlane.f32.xlu0 %v933
        %v935 = vpop.xlane.xlu0 %934
        %v936 = vrcp.pop %v932
        %v937 = vrcp.pop %v935
        %v938 = vmul.f32 %v927, %v936
        %v939 = vmul.f32 %v929, %v937
        %v940 = vpack.c.bf16 %v938, %v938
        %v941 = vpack.c.bf16 %v939, %v939
        %942 = vrot.lane.b32.xlu0 %v758, 56
        %v943 = vpop.permute.xlu0 %942
        %v945 = vsel %vm761, %v940, 0
        %v948 = vsel %vm834, %v943, 0
        %950 = vmatpush.bf16.msra.mxu0 0
        %951 = vmatpush.bf16.msra.mxu0 0
        %952 = vmatpush.bf16.msra.mxu0 0
        %953 = vmatpush.bf16.msra.mxu0 0
        %954 = vmatpush.bf16.msra.mxu0 0
        %955 = vmatpush.bf16.msra.mxu0 0
        %956 = vmatpush.bf16.msra.mxu0 0
        %957 = vmatpush.bf16.msra.mxu0 %v948
        %958 = vmatmul.bf16.gmra.mxu0 %v945
        %v959 = vpop.f32.mrf.mxu0
        %v960 = vadd.f32 0.0, %v959
        %v961 = vpop.f32.mrf.mxu0
        %962 = vdwg.mxu0
        %963 = vrot.lane.b32.xlu0 %v783, 56
        %v964 = vpop.permute.xlu0 %963
        %v966 = vsel %vm761, %v941, 0
        %v969 = vsel %vm834, %v964, 0
        %971 = vmatpush.bf16.msra.mxu0 0
        %972 = vmatpush.bf16.msra.mxu0 0
        %973 = vmatpush.bf16.msra.mxu0 0
        %974 = vmatpush.bf16.msra.mxu0 0
        %975 = vmatpush.bf16.msra.mxu0 0
        %976 = vmatpush.bf16.msra.mxu0 0
        %977 = vmatpush.bf16.msra.mxu0 0
        %978 = vmatpush.bf16.msra.mxu0 %v969
        %979 = vmatmul.bf16.gmra.mxu0 %v966
        %v980 = vpop.f32.mrf.mxu0
        %v981 = vadd.f32 0.0, %v980
        %v982 = vpop.f32.mrf.mxu0
        %983 = vdwg.mxu0
        %984 = vrot.lane.b32.xlu0 %v758, 112
        %v985 = vpop.permute.xlu0 %984
        %986 = vrot.lane.b32.xlu0 %v758, 80
        %v987 = vpop.permute.xlu0 %986
        %v989 = vsel %vm761, %v985, 0
        %v992 = vsel %vm761, %v987, 0
        %994 = vmatpush.bf16.xpose.msra.mxu0 0
        %995 = vmatpush.bf16.xpose.msra.mxu0 0
        %996 = vmatpush.bf16.xpose.msra.mxu0 0
        %997 = vmatpush.bf16.xpose.msra.mxu0 0
        %998 = vmatpush.bf16.xpose.msra.mxu0 0
        %999 = vmatpush.bf16.xpose.msra.mxu0 0
        %1000 = vmatpush.bf16.xpose.msra.mxu0 0
        %1001 = vmatpush.bf16.xpose.msra.mxu0 %v992
        %1002 = vmatmul.bf16.gmra.mxu0 %v989
        %v1003 = vpop.f32.mrf.mxu0
        %v1004 = vadd.f32 0.0, %v1003
        %v1005 = vpop.f32.mrf.mxu0
        %1006 = vdwg.mxu0
        %1007 = vrot.lane.b32.xlu0 %v783, 112
        %v1008 = vpop.permute.xlu0 %1007
        %1009 = vrot.lane.b32.xlu0 %v783, 80
        %v1010 = vpop.permute.xlu0 %1009
        %v1012 = vsel %vm761, %v1008, 0
        %v1015 = vsel %vm761, %v1010, 0
        %1017 = vmatpush.bf16.xpose.msra.mxu0 0
        %1018 = vmatpush.bf16.xpose.msra.mxu0 0
        %1019 = vmatpush.bf16.xpose.msra.mxu0 0
        %1020 = vmatpush.bf16.xpose.msra.mxu0 0
        %1021 = vmatpush.bf16.xpose.msra.mxu0 0
        %1022 = vmatpush.bf16.xpose.msra.mxu0 0
        %1023 = vmatpush.bf16.xpose.msra.mxu0 0
        %1024 = vmatpush.bf16.xpose.msra.mxu0 %v1015
        %1025 = vmatmul.bf16.gmra.mxu0 %v1012
        %v1026 = vpop.f32.mrf.mxu0
        %v1027 = vadd.f32 0.0, %v1026
        %v1028 = vpop.f32.mrf.mxu0
        %1029 = vdwg.mxu0
        %v1030 = vsel %vm761, %v1004, -inf
        %1031 = vmax.xlane.f32.xlu0 %v1030
        %v1032 = vpop.xlane.xlu0 %1031
        %v1033 = vsel %vm761, %v1027, -inf
        %1034 = vmax.xlane.f32.xlu0 %v1033
        %v1035 = vpop.xlane.xlu0 %1034
        %v1036 = vsub.f32 %v1004, %v1032
        %v1037 = vsub.f32 %v1027, %v1035
        %v1038 = vmul.f32 %v1036, 1.442695
        %v1039 = vpow.pop %v1038
        %v1040 = vmul.f32 %v1037, 1.442695
        %v1041 = vpow.pop %v1040
        %v1042 = vsel %vm761, %v1039, 0.0
        %1043 = vadd.xlane.f32.xlu0 %v1042
        %v1044 = vpop.xlane.xlu0 %1043
        %v1045 = vsel %vm761, %v1041, 0.0
        %1046 = vadd.xlane.f32.xlu0 %v1045
        %v1047 = vpop.xlane.xlu0 %1046
        %v1048 = vrcp.pop %v1044
        %v1049 = vrcp.pop %v1047
        %v1050 = vmul.f32 %v1039, %v1048
        %v1051 = vmul.f32 %v1041, %v1049
        %v1052 = vpack.c.bf16 %v1050, %v1050
        %v1053 = vpack.c.bf16 %v1051, %v1051
        %1054 = vrot.lane.b32.xlu0 %v758, 48
        %v1055 = vpop.permute.xlu0 %1054
        %v1057 = vsel %vm761, %v1052, 0
        %v1060 = vsel %vm834, %v1055, 0
        %1062 = vmatpush.bf16.msra.mxu0 0
        %1063 = vmatpush.bf16.msra.mxu0 0
        %1064 = vmatpush.bf16.msra.mxu0 0
        %1065 = vmatpush.bf16.msra.mxu0 0
        %1066 = vmatpush.bf16.msra.mxu0 0
        %1067 = vmatpush.bf16.msra.mxu0 0
        %1068 = vmatpush.bf16.msra.mxu0 0
        %1069 = vmatpush.bf16.msra.mxu0 %v1060
        %1070 = vmatmul.bf16.gmra.mxu0 %v1057
        %v1071 = vpop.f32.mrf.mxu0
        %v1072 = vadd.f32 0.0, %v1071
        %v1073 = vpop.f32.mrf.mxu0
        %1074 = vdwg.mxu0
        %1075 = vrot.lane.b32.xlu0 %v783, 48
        %v1076 = vpop.permute.xlu0 %1075
        %v1078 = vsel %vm761, %v1053, 0
        %v1081 = vsel %vm834, %v1076, 0
        %1083 = vmatpush.bf16.msra.mxu0 0
        %1084 = vmatpush.bf16.msra.mxu0 0
        %1085 = vmatpush.bf16.msra.mxu0 0
        %1086 = vmatpush.bf16.msra.mxu0 0
        %1087 = vmatpush.bf16.msra.mxu0 0
        %1088 = vmatpush.bf16.msra.mxu0 0
        %1089 = vmatpush.bf16.msra.mxu0 0
        %1090 = vmatpush.bf16.msra.mxu0 %v1081
        %1091 = vmatmul.bf16.gmra.mxu0 %v1078
        %v1092 = vpop.f32.mrf.mxu0
        %v1093 = vadd.f32 0.0, %v1092
        %v1094 = vpop.f32.mrf.mxu0
        %1095 = vdwg.mxu0
        %1096 = vrot.lane.b32.xlu0 %v758, 104
        %v1097 = vpop.permute.xlu0 %1096
        %1098 = vrot.lane.b32.xlu0 %v758, 72
        %v1099 = vpop.permute.xlu0 %1098
        %v1101 = vsel %vm761, %v1097, 0
        %v1104 = vsel %vm761, %v1099, 0
        %1106 = vmatpush.bf16.xpose.msra.mxu0 0
        %1107 = vmatpush.bf16.xpose.msra.mxu0 0
        %1108 = vmatpush.bf16.xpose.msra.mxu0 0
        %1109 = vmatpush.bf16.xpose.msra.mxu0 0
        %1110 = vmatpush.bf16.xpose.msra.mxu0 0
        %1111 = vmatpush.bf16.xpose.msra.mxu0 0
        %1112 = vmatpush.bf16.xpose.msra.mxu0 0
        %1113 = vmatpush.bf16.xpose.msra.mxu0 %v1104
        %1114 = vmatmul.bf16.gmra.mxu0 %v1101
        %v1115 = vpop.f32.mrf.mxu0
        %v1116 = vadd.f32 0.0, %v1115
        %v1117 = vpop.f32.mrf.mxu0
        %1118 = vdwg.mxu0
        %1119 = vrot.lane.b32.xlu0 %v783, 104
        %v1120 = vpop.permute.xlu0 %1119
        %1121 = vrot.lane.b32.xlu0 %v783, 72
        %v1122 = vpop.permute.xlu0 %1121
        %v1124 = vsel %vm761, %v1120, 0
        %v1127 = vsel %vm761, %v1122, 0
        %1129 = vmatpush.bf16.xpose.msra.mxu0 0
        %1130 = vmatpush.bf16.xpose.msra.mxu0 0
        %1131 = vmatpush.bf16.xpose.msra.mxu0 0
        %1132 = vmatpush.bf16.xpose.msra.mxu0 0
        %1133 = vmatpush.bf16.xpose.msra.mxu0 0
        %1134 = vmatpush.bf16.xpose.msra.mxu0 0
        %1135 = vmatpush.bf16.xpose.msra.mxu0 0
        %1136 = vmatpush.bf16.xpose.msra.mxu0 %v1127
        %1137 = vmatmul.bf16.gmra.mxu0 %v1124
        %v1138 = vpop.f32.mrf.mxu0
        %v1139 = vadd.f32 0.0, %v1138
        %v1140 = vpop.f32.mrf.mxu0
        %1141 = vdwg.mxu0
        %v1142 = vsel %vm761, %v1116, -inf
        %1143 = vmax.xlane.f32.xlu0 %v1142
        %v1144 = vpop.xlane.xlu0 %1143
        %v1145 = vsel %vm761, %v1139, -inf
        %1146 = vmax.xlane.f32.xlu0 %v1145
        %v1147 = vpop.xlane.xlu0 %1146
        %v1148 = vsub.f32 %v1116, %v1144
        %v1149 = vsub.f32 %v1139, %v1147
        %v1150 = vmul.f32 %v1148, 1.442695
        %v1151 = vpow.pop %v1150
        %v1152 = vmul.f32 %v1149, 1.442695
        %v1153 = vpow.pop %v1152
        %v1154 = vsel %vm761, %v1151, 0.0
        %1155 = vadd.xlane.f32.xlu0 %v1154
        %v1156 = vpop.xlane.xlu0 %1155
        %v1157 = vsel %vm761, %v1153, 0.0
        %1158 = vadd.xlane.f32.xlu0 %v1157
        %v1159 = vpop.xlane.xlu0 %1158
        %v1160 = vrcp.pop %v1156
        %v1161 = vrcp.pop %v1159
        %v1162 = vmul.f32 %v1151, %v1160
        %v1163 = vmul.f32 %v1153, %v1161
        %v1164 = vpack.c.bf16 %v1162, %v1162
        %v1165 = vpack.c.bf16 %v1163, %v1163
        %1166 = vrot.lane.b32.xlu0 %v758, 40
        %v1167 = vpop.permute.xlu0 %1166
        %v1169 = vsel %vm761, %v1164, 0
        %v1172 = vsel %vm834, %v1167, 0
        %1174 = vmatpush.bf16.msra.mxu0 0
        %1175 = vmatpush.bf16.msra.mxu0 0
        %1176 = vmatpush.bf16.msra.mxu0 0
        %1177 = vmatpush.bf16.msra.mxu0 0
        %1178 = vmatpush.bf16.msra.mxu0 0
        %1179 = vmatpush.bf16.msra.mxu0 0
        %1180 = vmatpush.bf16.msra.mxu0 0
        %1181 = vmatpush.bf16.msra.mxu0 %v1172
        %1182 = vmatmul.bf16.gmra.mxu0 %v1169
        %v1183 = vpop.f32.mrf.mxu0
        %v1184 = vadd.f32 0.0, %v1183
        %v1185 = vpop.f32.mrf.mxu0
        %1186 = vdwg.mxu0
        %1187 = vrot.lane.b32.xlu0 %v783, 40
        %v1188 = vpop.permute.xlu0 %1187
        %v1190 = vsel %vm761, %v1165, 0
        %v1193 = vsel %vm834, %v1188, 0
        %1195 = vmatpush.bf16.msra.mxu0 0
        %1196 = vmatpush.bf16.msra.mxu0 0
        %1197 = vmatpush.bf16.msra.mxu0 0
        %1198 = vmatpush.bf16.msra.mxu0 0
        %1199 = vmatpush.bf16.msra.mxu0 0
        %1200 = vmatpush.bf16.msra.mxu0 0
        %1201 = vmatpush.bf16.msra.mxu0 0
        %1202 = vmatpush.bf16.msra.mxu0 %v1193
        %1203 = vmatmul.bf16.gmra.mxu0 %v1190
        %v1204 = vpop.f32.mrf.mxu0
        %v1205 = vadd.f32 0.0, %v1204
        %v1206 = vpop.f32.mrf.mxu0
        %1207 = vdwg.mxu0
        %1210 = vrot.lane.b32.xlu0 %v960, 8
        %v1211 = vpop.permute.xlu0 %1210
        %1212 = vrot.lane.b32.xlu0 %v981, 8
        %v1213 = vpop.permute.xlu0 %1212
        %1218 = vrot.lane.b32.xlu0 %v1072, 16
        %v1219 = vpop.permute.xlu0 %1218
        %1220 = vrot.lane.b32.xlu0 %v1093, 16
        %v1221 = vpop.permute.xlu0 %1220
        %1226 = vrot.lane.b32.xlu0 %v1184, 24
        %v1227 = vpop.permute.xlu0 %1226
        %1228 = vrot.lane.b32.xlu0 %v1205, 24
        %v1229 = vpop.permute.xlu0 %1228
        %v1232 = vsel %vm761, %v848, %v1211
        %v1233 = vsel %vm761, %v869, %v1213
        %vm1234 = vcmask 130048
        %v1235 = vsel %vm1234, %v1232, %v1219
        %v1236 = vsel %vm1234, %v1233, %v1221
        %vm1237 = vcmask 195584
        %v1238 = vsel %vm1237, %v1235, %v1227
        %v1239 = vsel %vm1237, %v1236, %v1229
        %v1240 = vpack.c.bf16 %v1239, %v1238
        %v1241 = vld [vmem:[%s679] sm:$0xf]
        %v1242 = vld [vmem:[%s679 + $0x4] sm:$0xf]
        %v1243 = vld [vmem:[%s679 + $0x8] sm:$0xf]
        %v1244 = vld [vmem:[%s679 + $0xc] sm:$0xf]
        %v1245 = vld [vmem:[%s682] sm:$0x1]
        %v1247 = vperm.slane %v1245, 0
        %v1253 = vunpack.c.l.b16 %v1241
        %v1254 = vunpack.c.l.b16 %v1242
        %v1255 = vunpack.c.l.b16 %v1243
        %v1256 = vunpack.c.l.b16 %v1244
        %v1257 = vpack.c.b16 %v1254, %v1253
        %v1258 = vpack.c.b16 %v1256, %v1255
        %v1262 = vsel %vm736, %v1240, 0
        %1264 = vmatpush.bf16.msra.mxu0 0
        %1265 = vmatpush.bf16.msra.mxu0 0
        %1266 = vmatpush.bf16.msra.mxu0 0
        %1267 = vmatpush.bf16.msra.mxu0 0
        %1268 = vmatpush.bf16.msra.mxu0 0
        %1269 = vmatpush.bf16.msra.mxu0 0
        %1270 = vmatpush.bf16.msra.mxu0 %v1258
        %1271 = vmatpush.bf16.msra.mxu0 %v1257
        %1272 = vmatmul.bf16.gmra.mxu0 %v1262
        %v1273 = vpop.f32.mrf.mxu0
        %v1274 = vadd.f32 %v1247, %v1273
        %v1275 = vpop.f32.mrf.mxu0
        %v1276 = vadd.f32 %v1247, %v1275
        %1277 = vdwg.mxu0
        %v1278 = vadd.f32 %v713, %v1274
        %v1279 = vadd.f32 %v714, %v1276
        %v1280 = vld [vmem:[%s685] sm:$0x1]
        %v1281 = vld [vmem:[%s688] sm:$0x1]
        %v1282 = vsel %vm736, %v1278, 0.0
        %1283 = vadd.xlane.f32.xlu0 %v1282
        %v1284 = vpop.xlane.xlu0 %1283
        %v1285 = vsel %vm736, %v1279, 0.0
        %1286 = vadd.xlane.f32.xlu0 %v1285
        %v1287 = vpop.xlane.xlu0 %1286
        %v1288 = vrcp.pop 32.0
        %v1289 = vmul.f32 32.0, %v1288
        %v1290 = vsub.f32 1.0, %v1289
        %v1291 = vmul.f32 %v1288, %v1290
        %v1292 = vadd.f32 %v1288, %v1291
        %vm1293 = vweird.f32 %v1288
        %v1294 = vsel %vm1293, %v1288, %v1292
        %v1295 = vmul.f32 %v1284, %v1294
        %v1296 = vmul.f32 %v1287, %v1294
        %v1297 = vsub.f32 %v1278, %v1295
        %v1298 = vsub.f32 %v1279, %v1296
        %v1299 = vmul.f32 %v1297, %v1297
        %v1300 = vmul.f32 %v1298, %v1298
        %v1301 = vsel %vm736, %v1299, 0.0
        %1302 = vadd.xlane.f32.xlu0 %v1301
        %v1303 = vpop.xlane.xlu0 %1302
        %v1304 = vsel %vm736, %v1300, 0.0
        %1305 = vadd.xlane.f32.xlu0 %v1304
        %v1306 = vpop.xlane.xlu0 %1305
        %v1307 = vmul.f32 %v1303, %v1294
        %v1308 = vmul.f32 %v1306, %v1294
        %v1309 = vadd.f32 %v1307, 1e-05
        %v1310 = vadd.f32 %v1308, 1e-05
        %v1311 = vrsqrt.pop %v1309
        %v1312 = vmul.f32 %v1311, %v1309
        %v1313 = vmul.f32 %v1312, %v1311
        %v1314 = vmul.f32 0.5, %v1313
        %v1315 = vsub.f32 1.5, %v1314
        %v1316 = vmul.f32 %v1311, %v1315
        %vm1317 = vweird.f32 %v1309
        %vm1318 = vweird.f32 %v1311
        %vm1319 = vmor %vm1317, %vm1318
        %v1320 = vsel %vm1319, %v1311, %v1316
        %v1321 = vrsqrt.pop %v1310
        %v1322 = vmul.f32 %v1321, %v1310
        %v1323 = vmul.f32 %v1322, %v1321
        %v1324 = vmul.f32 0.5, %v1323
        %v1325 = vsub.f32 1.5, %v1324
        %v1326 = vmul.f32 %v1321, %v1325
        %vm1327 = vweird.f32 %v1310
        %vm1328 = vweird.f32 %v1321
        %vm1329 = vmor %vm1327, %vm1328
        %v1330 = vsel %vm1329, %v1321, %v1326
        %v1331 = vmul.f32 %v1297, %v1320
        %v1332 = vmul.f32 %v1298, %v1330
        %v1334 = vperm.slane %v1280, 0
        %v1336 = vmul.f32 %v1331, %v1334
        %v1337 = vmul.f32 %v1332, %v1334
        %v1339 = vperm.slane %v1281, 0
        %v1341 = vadd.f32 %v1336, %v1339
        %v1342 = vadd.f32 %v1337, %v1339
        %v1343 = vpack.c.bf16 %v1342, %v1341
        %v1344 = vld [vmem:[%s693] sm:$0xf]
        %v1345 = vld [vmem:[%s693 + $0x4] sm:$0xf]
        %v1346 = vld [vmem:[%s693 + $0x8] sm:$0xf]
        %v1347 = vld [vmem:[%s693 + $0xc] sm:$0xf]
        %v1348 = vld [vmem:[%s567] sm:$0x1]
        %v1350 = vperm.slane %v1348, 0
        %v1356 = vunpack.c.l.b16 %v1344
        %v1357 = vunpack.c.l.b16 %v1345
        %v1358 = vunpack.c.l.b16 %v1346
        %v1359 = vunpack.c.l.b16 %v1347
        %v1360 = vpack.c.b16 %v1357, %v1356
        %v1361 = vpack.c.b16 %v1359, %v1358
        %v1365 = vsel %vm736, %v1343, 0
        %1367 = vmatpush.bf16.msra.mxu0 0
        %1368 = vmatpush.bf16.msra.mxu0 0
        %1369 = vmatpush.bf16.msra.mxu0 0
        %1370 = vmatpush.bf16.msra.mxu0 0
        %1371 = vmatpush.bf16.msra.mxu0 0
        %1372 = vmatpush.bf16.msra.mxu0 0
        %1373 = vmatpush.bf16.msra.mxu0 %v1361
        %1374 = vmatpush.bf16.msra.mxu0 %v1360
        %1375 = vmatmul.bf16.gmra.mxu0 %v1365
        %v1376 = vpop.f32.mrf.mxu0
        %v1377 = vadd.f32 %v1350, %v1376
        %v1378 = vpop.f32.mrf.mxu0
        %v1379 = vadd.f32 %v1350, %v1378
        %1380 = vdwg.mxu0
        %v1381 = vmax.f32 %v1377, 0.0
        %v1382 = vmax.f32 %v1379, 0.0
        %v1383 = vpack.c.bf16 %v1382, %v1381
        %v1384 = vld [vmem:[%s698] sm:$0xf]
        %v1385 = vld [vmem:[%s698 + $0x4] sm:$0xf]
        %v1386 = vld [vmem:[%s698 + $0x8] sm:$0xf]
        %v1387 = vld [vmem:[%s698 + $0xc] sm:$0xf]
        %v1388 = vld [vmem:[%s698 + $0x10] sm:$0xf]
        %v1389 = vld [vmem:[%s698 + $0x14] sm:$0xf]
        %v1390 = vld [vmem:[%s698 + $0x18] sm:$0xf]
        %v1391 = vld [vmem:[%s698 + $0x1c] sm:$0xf]
        %v1392 = vld [vmem:[%s576] sm:$0x1]
        %v1394 = vperm.slane %v1392, 0
        %v1404 = vunpack.c.l.b16 %v1384
        %v1405 = vunpack.c.l.b16 %v1385
        %v1406 = vunpack.c.l.b16 %v1386
        %v1407 = vunpack.c.l.b16 %v1387
        %v1408 = vunpack.c.l.b16 %v1388
        %v1409 = vunpack.c.l.b16 %v1389
        %v1410 = vunpack.c.l.b16 %v1390
        %v1411 = vunpack.c.l.b16 %v1391
        %v1412 = vpack.c.b16 %v1405, %v1404
        %v1413 = vpack.c.b16 %v1407, %v1406
        %v1414 = vpack.c.b16 %v1409, %v1408
        %v1415 = vpack.c.b16 %v1411, %v1410
        %vm1420 = vcmask 523264
        %v1422 = vsel %vm1420, %v1383, 0
        %1424 = vmatpush.bf16.msra.mxu0 0
        %1425 = vmatpush.bf16.msra.mxu0 0
        %1426 = vmatpush.bf16.msra.mxu0 0
        %1427 = vmatpush.bf16.msra.mxu0 0
        %1428 = vmatpush.bf16.msra.mxu0 %v1415
        %1429 = vmatpush.bf16.msra.mxu0 %v1414
        %1430 = vmatpush.bf16.msra.mxu0 %v1413
        %1431 = vmatpush.bf16.msra.mxu0 %v1412
        %1432 = vmatmul.bf16.gmra.mxu0 %v1422
        %v1433 = vpop.f32.mrf.mxu0
        %v1434 = vadd.f32 %v1394, %v1433
        %v1435 = vpop.f32.mrf.mxu0
        %v1436 = vadd.f32 %v1394, %v1435
        %1437 = vdwg.mxu0
        %v1438 = vadd.f32 %v1341, %v1434
        %v1439 = vadd.f32 %v1342, %v1436
        %v1440 = vld [vmem:[%s585] sm:$0x1]
        %v1441 = vld [vmem:[%s701] sm:$0x1]
        %v1442 = vsel %vm736, %v1438, 0.0
        %1443 = vadd.xlane.f32.xlu0 %v1442
        %v1444 = vpop.xlane.xlu0 %1443
        %v1445 = vsel %vm736, %v1439, 0.0
        %1446 = vadd.xlane.f32.xlu0 %v1445
        %v1447 = vpop.xlane.xlu0 %1446
        %v1448 = vmul.f32 %v1444, %v1294
        %v1449 = vmul.f32 %v1447, %v1294
        %v1450 = vsub.f32 %v1438, %v1448
        %v1451 = vsub.f32 %v1439, %v1449
        %v1452 = vmul.f32 %v1450, %v1450
        %v1453 = vmul.f32 %v1451, %v1451
        %v1454 = vsel %vm736, %v1452, 0.0
        %1455 = vadd.xlane.f32.xlu0 %v1454
        %v1456 = vpop.xlane.xlu0 %1455
        %v1457 = vsel %vm736, %v1453, 0.0
        %1458 = vadd.xlane.f32.xlu0 %v1457
        %v1459 = vpop.xlane.xlu0 %1458
        %v1460 = vmul.f32 %v1456, %v1294
        %v1461 = vmul.f32 %v1459, %v1294
        %v1462 = vadd.f32 %v1460, 1e-05
        %v1463 = vadd.f32 %v1461, 1e-05
        %v1464 = vrsqrt.pop %v1462
        %v1465 = vmul.f32 %v1464, %v1462
        %v1466 = vmul.f32 %v1465, %v1464
        %v1467 = vmul.f32 0.5, %v1466
        %v1468 = vsub.f32 1.5, %v1467
        %v1469 = vmul.f32 %v1464, %v1468
        %vm1470 = vweird.f32 %v1462
        %vm1471 = vweird.f32 %v1464
        %vm1472 = vmor %vm1470, %vm1471
        %v1473 = vsel %vm1472, %v1464, %v1469
        %v1474 = vrsqrt.pop %v1463
        %v1475 = vmul.f32 %v1474, %v1463
        %v1476 = vmul.f32 %v1475, %v1474
        %v1477 = vmul.f32 0.5, %v1476
        %v1478 = vsub.f32 1.5, %v1477
        %v1479 = vmul.f32 %v1474, %v1478
        %vm1480 = vweird.f32 %v1463
        %vm1481 = vweird.f32 %v1474
        %vm1482 = vmor %vm1480, %vm1481
        %v1483 = vsel %vm1482, %v1474, %v1479
        %v1484 = vmul.f32 %v1450, %v1473
        %v1485 = vmul.f32 %v1451, %v1483
        %v1487 = vperm.slane %v1440, 0
        %v1489 = vmul.f32 %v1484, %v1487
        %v1490 = vmul.f32 %v1485, %v1487
        %v1492 = vperm.slane %v1441, 0
        %v1494 = vadd.f32 %v1489, %v1492
        %v1495 = vadd.f32 %v1490, %v1492
        %1496 = vst.msk [vmem:[#allocation10] sm:$0xff] %vm736, %v1494
        %1497 = vst.msk [vmem:[#allocation10 + $0x8] sm:$0xff] %vm736, %v1495
        // Predicated region
        $region93: #{tpu_custom_call.1} parent=71 // pred_check
          %p1498 = pneg %p400
        $region94: #{tpu_custom_call.1} parent=71 // pred_check_branch
          %1500 = sbr.rel (%p1498) target = $region96
        $region95: #{tpu_custom_call.1} parent=71 // pred_region
          %s1501 = smul.u32 2, %s36
          %1503 = vsyncadd [#allocation4], 0
          %s1504 = smul.addr %s1501, 8
          %s1505 = scalar_lea.hbm %s13, %s1504
          %s1506 = sshll.u32 [#allocation10], 4
          %s1507 = int_to_ptr.vmem [resolvable:$true] %s1506
          %s1508 = sshll.u32 %s1505, 4
          %s1509 = int_to_ptr.hbm [resolvable:$true] %s1508
          %1514 = dma.vmem_to_hbm [thread:$0]  %s1507, 256, %s1509, [#allocation4], 128, 128, 8
        $region96: #{tpu_custom_call.1} parent=71 // pred_fallthru
          _
        // Predicated region
        $region97: #{tpu_custom_call.1} parent=71 // pred_check
          %p1515 = pneg %p400
        $region98: #{tpu_custom_call.1} parent=71 // pred_check_branch
          %1517 = sbr.rel (%p1515) target = $region100
        $region99: #{tpu_custom_call.1} parent=71 // pred_region
          %1519 = dma.done [#allocation4], 256
        $region100: #{tpu_custom_call.1} parent=71 // pred_fallthru
          _
      $region72: #{tpu_custom_call.1} parent=5 // pred_fallthru
        _
      %p1520 = scmp.le.s32.totalorder 2, %s27
      // Predicated region
      $region101: #{tpu_custom_call.1} parent=5 // pred_check
        %p1521 = pneg %p1520
      $region102: #{tpu_custom_call.1} parent=5 // pred_check_branch
        %1523 = sbr.rel (%p1521) target = $region104
      $region103: #{tpu_custom_call.1} parent=5 // pred_region
        %s1524 = ssub.s32 %s27, 2
      $region104: #{tpu_custom_call.1} parent=5 // pred_fallthru
        _
    $region6: #{tpu_custom_call.1} parent=1 // loop_footer
      %s31 = sadd.s32 1, %s27
    $region7: #{tpu_custom_call.1} parent=1 // loop_footer_branch
      %26 = sbr.rel target = $region3
    $region8: #{tpu_custom_call.1} parent=1 // loop_exit
      _
    %1525 = vsyncpa [#allocation3], 1
    %s1526 = scalar_lea.sflag [#allocation3], 1
    %1527 = vsyncpa %s1526, 1
    %1528 = vsyncpa [#allocation6], 1
    %s1529 = scalar_lea.sflag [#allocation6], 1
    %1530 = vsyncpa %s1529, 1
    %1531 = vsyncpa [#allocation9], 1
    %s1532 = scalar_lea.sflag [#allocation9], 1
    %1533 = vsyncpa %s1532, 1
    %1534 = vsyncpa [#allocation4], 1
    %s1535 = scalar_lea.sflag [#allocation4], 1
    %1536 = vsyncpa %s1535, 1

</llo_original>
